<compile_context>
chip_gen: v7x
topology: tpu7x:2x2x1
jax: 0.10.0
libtpu: 0.0.40
codegen_flags: <defaults>
</compile_context>

<pallas_src>
import numpy as np

import jax
import jax.numpy as jnp
from jax.experimental import pallas as pl
from jax.experimental.pallas import tpu as pltpu


MXU_DTYPE = jnp.bfloat16

# Fixed geometry implied by the module: 4x16x16 input, two stride-2 convs -> 8x8 -> 4x4.
IN_CH, IMG = 4, 16
C1, C2 = 16, 32
OH1, OH2 = 8, 4            # spatial extent after conv1 / conv2
SG = OH2 + 1               # 5: parity-packed conv1 grid extent
HIDDEN, N_ACT = 64, 8
K1 = IN_CH * 9             # 36: conv1 im2col features per parity group, (c, kh, kw) order
CP = 4 * C1                # 64: parity-packed conv1 channels, (di, dj, c) order
KCOLS = 4 * K1 + 4         # 148: 4 parity patch blocks + 4 bias-indicator columns
NPOS = OH2 * OH2           # 16 conv2 output positions


def _make_valid_indicator():
    """[25, 4]: 1 where parity slot (hp, wp, di, dj) maps to a real conv1 output."""
    v = np.zeros((SG * SG, 4), np.float32)
    for hp in range(SG):
        for wp in range(SG):
            for di in range(2):
                for dj in range(2):
                    oh, ow = 2 * hp + di - 1, 2 * wp + dj - 1
                    if 0 <= oh < OH1 and 0 <= ow < OH1:
                        v[hp * SG + wp, 2 * di + dj] = 1.0
    return v


def _make_border_mask():
    """[10, 10]: 1 on the valid conv1-output grid (oh, ow in [0,8)), 0 on the border."""
    b = np.zeros((2 * SG, 2 * SG), np.float32)
    b[1:1 + OH1, 1:1 + OH1] = 1.0
    return b


_VALID = _make_valid_indicator()
_BORDER = _make_border_mask()


# ----------------------------------------------------------------------------
# Deterministic parameter construction (synthetic, no checkpoint).
# ----------------------------------------------------------------------------
def init_qnet_params(key, in_ch=IN_CH, n_actions=N_ACT, hidden=HIDDEN):
    ks = jax.random.split(key, 8)
    s = 0.05
    return {
        "conv1_w": s * jax.random.normal(ks[0], (C1, in_ch, 3, 3), jnp.float32),
        "conv1_b": s * jax.random.normal(ks[1], (C1,), jnp.float32),
        "conv2_w": s * jax.random.normal(ks[2], (C2, C1, 3, 3), jnp.float32),
        "conv2_b": s * jax.random.normal(ks[3], (C2,), jnp.float32),
        "fc1_w": s * jax.random.normal(ks[4], (C2 * OH2 * OH2, hidden), jnp.float32),
        "fc1_b": s * jax.random.normal(ks[5], (hidden,), jnp.float32),
        "fc2_w": s * jax.random.normal(ks[6], (hidden, n_actions), jnp.float32),
        "fc2_b": s * jax.random.normal(ks[7], (n_actions,), jnp.float32),
    }


# ----------------------------------------------------------------------------
# One-time parameter rewrite (PyTorch layouts -> kernel layouts), at wrapper init only.
# ----------------------------------------------------------------------------
def prepare_net_params(params, mxu_dtype=MXU_DTYPE):
    p = {k: np.asarray(v, np.float32) for k, v in params.items()}

    # conv1 as one matmul over 4 parity-packed patch blocks -> block-diagonal weight,
    # plus 4 bias rows selected by the per-slot indicator columns (masked bias for free).
    # NOTE(v5e): K=148 > 128 forces two MXU passes there; a two-half K<=128 split of this
    # block-diagonal weight would halve conv1 passes on v5e (left as-is for v6e/v7x).
    w1mat = p["conv1_w"].reshape(C1, K1).T                            # [36, 16]
    w1 = np.zeros((KCOLS, CP), np.float32)
    for g in range(4):
        w1[g * K1:(g + 1) * K1, g * C1:(g + 1) * C1] = w1mat
        w1[4 * K1 + g, g * C1:(g + 1) * C1] = p["conv1_b"]

    # conv2 (3x3 stride 2) rewritten as a 2x2 stride-1 conv over the parity grid:
    #   tap t=2a+e, packed row (2*di+dj)*C1 + c  <-  conv2_w[:, c, 2a+di, 2e+dj]
    w2 = np.zeros((4, CP, C2), np.float32)
    for a in range(2):
        for e in range(2):
            for di in range(2):
                for dj in range(2):
                    i, j = 2 * a + di, 2 * e + dj
                    if i < 3 and j < 3:
                        w2[2 * a + e,
                           (2 * di + dj) * C1:(2 * di + dj + 1) * C1, :] = \
                            p["conv2_w"][:, :, i, j].T
    w2 = w2.reshape(4 * CP, C2)                                       # [256, 32]

    # fc1 rows: PyTorch flatten order (c, h, w) -> kernel's (h, w, c) order.
    wf1 = p["fc1_w"].reshape(C2, OH2, OH2, HIDDEN)
    wf1 = wf1.transpose(1, 2, 0, 3).reshape(C2 * OH2 * OH2, HIDDEN)   # [512, 64]

    return {
        "w1": jnp.asarray(w1, mxu_dtype),
        "w2": jnp.asarray(w2, mxu_dtype),
        "b2": jnp.asarray(p["conv2_b"].reshape(1, C2), jnp.float32),
        "wf1": jnp.asarray(wf1, mxu_dtype),
        "bf1": jnp.asarray(p["fc1_b"].reshape(1, HIDDEN), jnp.float32),
        "wf2": jnp.asarray(p["fc2_w"], mxu_dtype),
        "bf2": jnp.asarray(p["fc2_b"].reshape(1, N_ACT), jnp.float32),
    }


# ----------------------------------------------------------------------------
# Batch layout: pad to a multiple of 16 (bf16 sublane tile) so every in-kernel slice is
# sublane-aligned; cap the per-block batch at 128 and tile the rest over a parallel grid.
# ----------------------------------------------------------------------------
def _batch_layout(B):
    b_pad = -(-B // 16) * 16
    bt = min(b_pad, 128)
    b_pad = -(-b_pad // bt) * bt
    return b_pad, bt


# ----------------------------------------------------------------------------
# API-boundary layout prep (plain JAX, fused under jit): NCHW -> pre-blocked parity
# patches [G, 25*BT, 148]; block-local row = (hp*5 + wp)*BT + b, columns = 4 parity patch
# blocks of 36 (c, kh, kw) features + 4 bias-indicator columns.
# ----------------------------------------------------------------------------
def _conv1_patch_blocks(x, g, bt):
    B, C, H, W = x.shape
    assert (C, H, W) == (IN_CH, IMG, IMG), "kernel is specialized to 4x16x16 inputs"
    b_pad = g * bt
    xq = jnp.pad(x.astype(MXU_DTYPE),
                 ((0, b_pad - B), (0, 0), (3, 3), (3, 3)))            # [Bp, 4, 22, 22]
    # 3x3 taps over the 10x10 grid of conv1-output positions oh, ow in [-1, 8].
    taps = [xq[:, :, kh:kh + 20:2, kw:kw + 20:2]                      # [Bp, 4, 10, 10]
            for kh in range(3) for kw in range(3)]
    pat = jnp.stack(taps, axis=-1)                                    # [Bp, 4, 10, 10, 9]
    # Zero patches at invalid conv1 positions (conv2's zero-padding border).
    pat = pat * jnp.asarray(_BORDER, MXU_DTYPE)[None, None, :, :, None]
    pat = pat.transpose(2, 3, 0, 1, 4).reshape(2 * SG, 2 * SG, b_pad, K1)
    pat = pat.reshape(SG, 2, SG, 2, g, bt, K1)                        # [hp,di,wp,dj,G,bt,36]
    pat = pat.transpose(4, 0, 2, 5, 1, 3, 6)                          # [G,hp,wp,bt,di,dj,36]
    pat = pat.reshape(g, SG * SG * bt, 4 * K1)                        # [G, 25*bt, 144]
    ind = jnp.broadcast_to(jnp.asarray(_VALID, MXU_DTYPE)[None, :, None, :],
                           (g, SG * SG, bt, 4)).reshape(g, SG * SG * bt, 4)
    return jnp.concatenate([pat, ind], axis=-1)                       # [G, 25*bt, 148]


# ----------------------------------------------------------------------------
# The fused kernel: conv1 -> conv2 -> fc1 -> fc2; 4 large MXU dots, all intermediates in
# VMEM, only the final [BT, 8] Q-values are written to HBM.
# ----------------------------------------------------------------------------
def _fused_qnet_kernel(p_ref, w1_ref, w2_ref, b2_ref, wf1_ref, bf1_ref,
                       wf2_ref, bf2_ref, o_ref,
                       y_ref, x2_ref, z_ref, h1_ref):
    f32 = jnp.float32
    bt = o_ref.shape[0]

    # conv1: ONE dot over all 25 parity-grid positions of the block (K=148).  The conv1
    # bias and the conv2-padding mask are folded into the indicator columns / bias rows,
    # so invalid slots come out exactly 0 with no mask operand or separate bias add.
    y = jnp.dot(p_ref[0], w1_ref[...], preferred_element_type=f32)    # [25*bt, 64]
    y_ref[...] = jnp.maximum(y, 0.0).astype(y_ref.dtype)

    # Gather the 2x2 conv2 taps: 16 contiguous, sublane-aligned [4*bt, 64] slab copies
    # (bt is a multiple of 16, so every row offset is a whole bf16 sublane tile).
    for ph in range(OH2):
        dst = ph * OH2 * bt
        for a in range(2):
            for e in range(2):
                t = 2 * a + e
                src = ((ph + a) * SG + e) * bt
                x2_ref[dst:dst + OH2 * bt, t * CP:(t + 1) * CP] = (
                    y_ref[src:src + OH2 * bt, :])

    # conv2: ONE dot, K=256 (exactly fills the 256-deep v6e/v7x MXU).
    z = jnp.dot(x2_ref[...], w2_ref[...], preferred_element_type=f32)  # [16*bt, 32]
    z_ref[...] = jnp.maximum(z + b2_ref[...], 0.0).astype(z_ref.dtype)

    # Flatten: 16 lane-block copies (rows (h, w, b) -> 512 lanes per example).
    for s in range(NPOS):
        h1_ref[:, s * C2:(s + 1) * C2] = z_ref[s * bt:(s + 1) * bt, :]

    # fc1 (ONE K=512 dot) + fc2.
    h1 = jnp.dot(h1_ref[...], wf1_ref[...], preferred_element_type=f32)
    h1 = jnp.maximum(h1 + bf1_ref[...], 0.0).astype(wf2_ref.dtype)
    q = jnp.dot(h1, wf2_ref[...], preferred_element_type=f32) + bf2_ref[...]
    o_ref[...] = q.astype(o_ref.dtype)                                  # only HBM write


@jax.jit
def qnet_forward(prep, x):
    B = x.shape[0]
    b_pad, bt = _batch_layout(B)
    grid_b = b_pad // bt
    patches = _conv1_patch_blocks(x, grid_b, bt)                        # [G, 25*bt, 148]

    def _const2d(shape):
        return pl.BlockSpec(shape, lambda i: (0, 0))

    out = pl.pallas_call(
        _fused_qnet_kernel,
        out_shape=jax.ShapeDtypeStruct((b_pad, N_ACT), jnp.float32),
        grid=(grid_b,),
        in_specs=[
            pl.BlockSpec((1, SG * SG * bt, KCOLS), lambda i: (i, 0, 0)),
            _const2d((KCOLS, CP)),          # w1  [148, 64]
            _const2d((4 * CP, C2)),         # w2  [256, 32]
            _const2d((1, C2)),              # b2
            _const2d((C2 * NPOS, HIDDEN)),  # wf1 [512, 64]
            _const2d((1, HIDDEN)),          # bf1
            _const2d((HIDDEN, N_ACT)),      # wf2 [64, 8]
            _const2d((1, N_ACT)),           # bf2
        ],
        out_specs=pl.BlockSpec((bt, N_ACT), lambda i: (i, 0)),
        scratch_shapes=[
            pltpu.VMEM((SG * SG * bt, CP), MXU_DTYPE),      # y:  conv1 parity output
            pltpu.VMEM((NPOS * bt, 4 * CP), MXU_DTYPE),     # x2: gathered conv2 input
            pltpu.VMEM((NPOS * bt, C2), MXU_DTYPE),         # z:  conv2 output
            pltpu.VMEM((bt, C2 * NPOS), MXU_DTYPE),         # h1: fc1 input (flatten)
        ],
        compiler_params=pltpu.CompilerParams(
            dimension_semantics=("parallel",),              # shards batch blocks on v7x
            vmem_limit_bytes=32 * 1024 * 1024),
    )(patches, prep["w1"], prep["w2"], prep["b2"],
      prep["wf1"], prep["bf1"], prep["wf2"], prep["bf2"])
    return out[:B]


class QLearnWrapper:
    """JAX/Pallas equivalent of the PyTorch QLearnWrapper: an online net plus a frozen
    deep-copied target net; forward() dispatches to the selected one.  Both nets share
    one jitted program (params are traced args), so switching never recompiles.
    NOTE: a DQN training step that evaluates online(s) and target(s') could fuse the two
    nets into one call by concatenating parameter sets along N (wider MXU output)."""

    def __init__(self, params):
        self.online = params
        self.target = jax.tree_util.tree_map(jnp.array, params)   # deepcopy semantics
        self._online_prep = prepare_net_params(self.online)
        self._target_prep = prepare_net_params(self.target)

    def __call__(self, x, model="online"):
        if model == "online":
            return qnet_forward(self._online_prep, x)
        elif model == "target":
            return qnet_forward(self._target_prep, x)
        raise ValueError(f"unknown model {model!r}")


# ----------------------------------------------------------------------------
# Plain-numpy f32 reference (PyTorch semantics) for the correctness check.
# ----------------------------------------------------------------------------
def _reference_forward_np(params, x):
    p = {k: np.asarray(v) for k, v in params.items()}
    x = np.asarray(x)

    def conv(h, w, b, stride, pad):
        B, C, H, W = h.shape
        OC, _, k, _ = w.shape
        hp = np.pad(h, ((0, 0), (0, 0), (pad, pad), (pad, pad)))
        OH = (H + 2 * pad - k) // stride + 1
        OW = (W + 2 * pad - k) // stride + 1
        wm = w.reshape(OC, -1)
        out = np.zeros((B, OC, OH, OW), np.float32)
        for oh in range(OH):
            for ow in range(OW):
                patch = hp[:, :, oh * stride:oh * stride + k,
                           ow * stride:ow * stride + k].reshape(B, -1)
                out[:, :, oh, ow] = patch @ wm.T + b
        return out

    h = np.maximum(conv(x, p["conv1_w"], p["conv1_b"], 2, 1), 0.0)
    h = np.maximum(conv(h, p["conv2_w"], p["conv2_b"], 2, 1), 0.0)
    h = h.reshape(x.shape[0], -1)
    h = np.maximum(h @ p["fc1_w"] + p["fc1_b"], 0.0)
    return h @ p["fc2_w"] + p["fc2_b"]


if __name__ == "__main__":
    key = jax.random.PRNGKey(0)
    k_params, k_x = jax.random.split(key)

    params = init_qnet_params(k_params)
    wrapper = QLearnWrapper(params)

    # x: [B=2, C=4, H=16, W=16], NCHW like PyTorch.
    x = jax.random.normal(k_x, (2, IN_CH, IMG, IMG), jnp.float32)

    q_online = wrapper(x, model="online")
    q_target = wrapper(x, model="target")
    jax.block_until_ready(q_online)
    jax.block_until_ready(q_target)

    assert q_online.shape == (2, N_ACT)
    assert q_target.shape == (2, N_ACT)
    # target is an untouched copy of online -> identical outputs initially
    assert bool(jnp.allclose(q_online, q_target))

    # Numerical check vs. an f32 numpy reference (bf16 MXU operands + f32 accumulation
    # => small, bounded deviation).
    q_ref = _reference_forward_np(params, x)
    np.testing.assert_allclose(np.asarray(q_online), q_ref, rtol=3e-2, atol=5e-3)

    print("KERNEL_OK")
</pallas_src>

<mosaic_0001>
module attributes {stable_mosaic.version = 11 : i64} {
  func.func @_fused_qnet_kernel(%arg0: i32, %arg1: memref<1x400x148xbf16, #tpu.memory_space<vmem>>, %arg2: memref<148x64xbf16, #tpu.memory_space<vmem>>, %arg3: memref<256x32xbf16, #tpu.memory_space<vmem>>, %arg4: memref<1x32xf32, #tpu.memory_space<vmem>>, %arg5: memref<512x64xbf16, #tpu.memory_space<vmem>>, %arg6: memref<1x64xf32, #tpu.memory_space<vmem>>, %arg7: memref<64x8xbf16, #tpu.memory_space<vmem>>, %arg8: memref<1x8xf32, #tpu.memory_space<vmem>>, %arg9: memref<16x8xf32, #tpu.memory_space<vmem>>, %arg10: memref<400x64xbf16, #tpu.memory_space<vmem>>, %arg11: memref<256x256xbf16, #tpu.memory_space<vmem>>, %arg12: memref<256x32xbf16, #tpu.memory_space<vmem>>, %arg13: memref<16x512xbf16, #tpu.memory_space<vmem>>) attributes {dimension_semantics = [#tpu.dimension_semantics<parallel>], iteration_bounds = array<i64: 1>, scalar_prefetch = 0 : i64, scratch_operands = 4 : i64, tpu.core_type = #tpu.core_type<tc>, window_params = [{transform_indices = @transform_0, window_bounds = array<i64: 1, 400, 148>}, {pipeline_mode = #tpu.pipeline_mode<synchronous>, transform_indices = @transform_1, window_bounds = array<i64: 148, 64>}, {pipeline_mode = #tpu.pipeline_mode<synchronous>, transform_indices = @transform_2, window_bounds = array<i64: 256, 32>}, {pipeline_mode = #tpu.pipeline_mode<synchronous>, transform_indices = @transform_3, window_bounds = array<i64: 1, 32>}, {pipeline_mode = #tpu.pipeline_mode<synchronous>, transform_indices = @transform_4, window_bounds = array<i64: 512, 64>}, {pipeline_mode = #tpu.pipeline_mode<synchronous>, transform_indices = @transform_5, window_bounds = array<i64: 1, 64>}, {pipeline_mode = #tpu.pipeline_mode<synchronous>, transform_indices = @transform_6, window_bounds = array<i64: 64, 8>}, {pipeline_mode = #tpu.pipeline_mode<synchronous>, transform_indices = @transform_7, window_bounds = array<i64: 1, 8>}, {transform_indices = @transform_8, window_bounds = array<i64: 16, 8>}]} {
    %c0 = arith.constant 0 : index
    %c0_0 = arith.constant 0 : index
    %c0_1 = arith.constant 0 : index
    %0 = vector.load %arg1[%c0, %c0_0, %c0_1] : memref<1x400x148xbf16, #tpu.memory_space<vmem>>, vector<1x400x148xbf16>
    %1 = vector.shape_cast %0 : vector<1x400x148xbf16> to vector<400x148xbf16>
    %c0_2 = arith.constant 0 : index
    %c0_3 = arith.constant 0 : index
    %2 = vector.load %arg2[%c0_2, %c0_3] : memref<148x64xbf16, #tpu.memory_space<vmem>>, vector<148x64xbf16>
    %cst = arith.constant dense<0.000000e+00> : vector<400x64xf32>
    %3 = tpu.matmul %1, %2, %cst {dimension_numbers = #tpu.dot_dimension_numbers<[1], [0], [0], [1], [0, 0, 1, 1], [], []>} : vector<400x148xbf16>, vector<148x64xbf16>, vector<400x64xf32> -> vector<400x64xf32>
    %cst_4 = arith.constant 0.000000e+00 : f32
    %4 = vector.broadcast %cst_4 : f32 to vector<400x64xf32>
    %5 = arith.maximumf %3, %4 : vector<400x64xf32>
    %6 = arith.truncf %5 : vector<400x64xf32> to vector<400x64xbf16>
    %c0_5 = arith.constant 0 : index
    %c0_6 = arith.constant 0 : index
    %7 = vector.load %arg10[%c0_5, %c0_6] : memref<400x64xbf16, #tpu.memory_space<vmem>>, vector<400x64xbf16>
    tpu.vector_store %arg10[%c0_5, %c0_6], %6 {strides = array<i32>} : memref<400x64xbf16, #tpu.memory_space<vmem>>, vector<400x64xbf16>,
    %c0_7 = arith.constant 0 : index
    %c0_8 = arith.constant 0 : index
    %8 = vector.load %arg10[%c0_7, %c0_8] : memref<400x64xbf16, #tpu.memory_space<vmem>>, vector<64x64xbf16>
    %c0_9 = arith.constant 0 : index
    %c0_10 = arith.constant 0 : index
    %9 = vector.load %arg11[%c0_9, %c0_10] : memref<256x256xbf16, #tpu.memory_space<vmem>>, vector<64x64xbf16>
    tpu.vector_store %arg11[%c0_9, %c0_10], %8 {strides = array<i32>} : memref<256x256xbf16, #tpu.memory_space<vmem>>, vector<64x64xbf16>,
    %c16 = arith.constant 16 : index
    %c0_11 = arith.constant 0 : index
    %10 = vector.load %arg10[%c16, %c0_11] : memref<400x64xbf16, #tpu.memory_space<vmem>>, vector<64x64xbf16>
    %c0_12 = arith.constant 0 : index
    %c64 = arith.constant 64 : index
    %11 = vector.load %arg11[%c0_12, %c64] : memref<256x256xbf16, #tpu.memory_space<vmem>>, vector<64x64xbf16>
    tpu.vector_store %arg11[%c0_12, %c64], %10 {strides = array<i32>} : memref<256x256xbf16, #tpu.memory_space<vmem>>, vector<64x64xbf16>,
    %c80 = arith.constant 80 : index
    %c0_13 = arith.constant 0 : index
    %12 = vector.load %arg10[%c80, %c0_13] : memref<400x64xbf16, #tpu.memory_space<vmem>>, vector<64x64xbf16>
    %c0_14 = arith.constant 0 : index
    %c128 = arith.constant 128 : index
    %13 = vector.load %arg11[%c0_14, %c128] : memref<256x256xbf16, #tpu.memory_space<vmem>>, vector<64x64xbf16>
    tpu.vector_store %arg11[%c0_14, %c128], %12 {strides = array<i32>} : memref<256x256xbf16, #tpu.memory_space<vmem>>, vector<64x64xbf16>,
    %c96 = arith.constant 96 : index
    %c0_15 = arith.constant 0 : index
    %14 = vector.load %arg10[%c96, %c0_15] : memref<400x64xbf16, #tpu.memory_space<vmem>>, vector<64x64xbf16>
    %c0_16 = arith.constant 0 : index
    %c192 = arith.constant 192 : index
    %15 = vector.load %arg11[%c0_16, %c192] : memref<256x256xbf16, #tpu.memory_space<vmem>>, vector<64x64xbf16>
    tpu.vector_store %arg11[%c0_16, %c192], %14 {strides = array<i32>} : memref<256x256xbf16, #tpu.memory_space<vmem>>, vector<64x64xbf16>,
    %c80_17 = arith.constant 80 : index
    %c0_18 = arith.constant 0 : index
    %16 = vector.load %arg10[%c80_17, %c0_18] : memref<400x64xbf16, #tpu.memory_space<vmem>>, vector<64x64xbf16>
    %c64_19 = arith.constant 64 : index
    %c0_20 = arith.constant 0 : index
    %17 = vector.load %arg11[%c64_19, %c0_20] : memref<256x256xbf16, #tpu.memory_space<vmem>>, vector<64x64xbf16>
    tpu.vector_store %arg11[%c64_19, %c0_20], %16 {strides = array<i32>} : memref<256x256xbf16, #tpu.memory_space<vmem>>, vector<64x64xbf16>,
    %c96_21 = arith.constant 96 : index
    %c0_22 = arith.constant 0 : index
    %18 = vector.load %arg10[%c96_21, %c0_22] : memref<400x64xbf16, #tpu.memory_space<vmem>>, vector<64x64xbf16>
    %c64_23 = arith.constant 64 : index
    %c64_24 = arith.constant 64 : index
    %19 = vector.load %arg11[%c64_23, %c64_24] : memref<256x256xbf16, #tpu.memory_space<vmem>>, vector<64x64xbf16>
    tpu.vector_store %arg11[%c64_23, %c64_24], %18 {strides = array<i32>} : memref<256x256xbf16, #tpu.memory_space<vmem>>, vector<64x64xbf16>,
    %c160 = arith.constant 160 : index
    %c0_25 = arith.constant 0 : index
    %20 = vector.load %arg10[%c160, %c0_25] : memref<400x64xbf16, #tpu.memory_space<vmem>>, vector<64x64xbf16>
    %c64_26 = arith.constant 64 : index
    %c128_27 = arith.constant 128 : index
    %21 = vector.load %arg11[%c64_26, %c128_27] : memref<256x256xbf16, #tpu.memory_space<vmem>>, vector<64x64xbf16>
    tpu.vector_store %arg11[%c64_26, %c128_27], %20 {strides = array<i32>} : memref<256x256xbf16, #tpu.memory_space<vmem>>, vector<64x64xbf16>,
    %c176 = arith.constant 176 : index
    %c0_28 = arith.constant 0 : index
    %22 = vector.load %arg10[%c176, %c0_28] : memref<400x64xbf16, #tpu.memory_space<vmem>>, vector<64x64xbf16>
    %c64_29 = arith.constant 64 : index
    %c192_30 = arith.constant 192 : index
    %23 = vector.load %arg11[%c64_29, %c192_30] : memref<256x256xbf16, #tpu.memory_space<vmem>>, vector<64x64xbf16>
    tpu.vector_store %arg11[%c64_29, %c192_30], %22 {strides = array<i32>} : memref<256x256xbf16, #tpu.memory_space<vmem>>, vector<64x64xbf16>,
    %c160_31 = arith.constant 160 : index
    %c0_32 = arith.constant 0 : index
    %24 = vector.load %arg10[%c160_31, %c0_32] : memref<400x64xbf16, #tpu.memory_space<vmem>>, vector<64x64xbf16>
    %c128_33 = arith.constant 128 : index
    %c0_34 = arith.constant 0 : index
    %25 = vector.load %arg11[%c128_33, %c0_34] : memref<256x256xbf16, #tpu.memory_space<vmem>>, vector<64x64xbf16>
    tpu.vector_store %arg11[%c128_33, %c0_34], %24 {strides = array<i32>} : memref<256x256xbf16, #tpu.memory_space<vmem>>, vector<64x64xbf16>,
    %c176_35 = arith.constant 176 : index
    %c0_36 = arith.constant 0 : index
    %26 = vector.load %arg10[%c176_35, %c0_36] : memref<400x64xbf16, #tpu.memory_space<vmem>>, vector<64x64xbf16>
    %c128_37 = arith.constant 128 : index
    %c64_38 = arith.constant 64 : index
    %27 = vector.load %arg11[%c128_37, %c64_38] : memref<256x256xbf16, #tpu.memory_space<vmem>>, vector<64x64xbf16>
    tpu.vector_store %arg11[%c128_37, %c64_38], %26 {strides = array<i32>} : memref<256x256xbf16, #tpu.memory_space<vmem>>, vector<64x64xbf16>,
    %c240 = arith.constant 240 : index
    %c0_39 = arith.constant 0 : index
    %28 = vector.load %arg10[%c240, %c0_39] : memref<400x64xbf16, #tpu.memory_space<vmem>>, vector<64x64xbf16>
    %c128_40 = arith.constant 128 : index
    %c128_41 = arith.constant 128 : index
    %29 = vector.load %arg11[%c128_40, %c128_41] : memref<256x256xbf16, #tpu.memory_space<vmem>>, vector<64x64xbf16>
    tpu.vector_store %arg11[%c128_40, %c128_41], %28 {strides = array<i32>} : memref<256x256xbf16, #tpu.memory_space<vmem>>, vector<64x64xbf16>,
    %c256 = arith.constant 256 : index
    %c0_42 = arith.constant 0 : index
    %30 = vector.load %arg10[%c256, %c0_42] : memref<400x64xbf16, #tpu.memory_space<vmem>>, vector<64x64xbf16>
    %c128_43 = arith.constant 128 : index
    %c192_44 = arith.constant 192 : index
    %31 = vector.load %arg11[%c128_43, %c192_44] : memref<256x256xbf16, #tpu.memory_space<vmem>>, vector<64x64xbf16>
    tpu.vector_store %arg11[%c128_43, %c192_44], %30 {strides = array<i32>} : memref<256x256xbf16, #tpu.memory_space<vmem>>, vector<64x64xbf16>,
    %c240_45 = arith.constant 240 : index
    %c0_46 = arith.constant 0 : index
    %32 = vector.load %arg10[%c240_45, %c0_46] : memref<400x64xbf16, #tpu.memory_space<vmem>>, vector<64x64xbf16>
    %c192_47 = arith.constant 192 : index
    %c0_48 = arith.constant 0 : index
    %33 = vector.load %arg11[%c192_47, %c0_48] : memref<256x256xbf16, #tpu.memory_space<vmem>>, vector<64x64xbf16>
    tpu.vector_store %arg11[%c192_47, %c0_48], %32 {strides = array<i32>} : memref<256x256xbf16, #tpu.memory_space<vmem>>, vector<64x64xbf16>,
    %c256_49 = arith.constant 256 : index
    %c0_50 = arith.constant 0 : index
    %34 = vector.load %arg10[%c256_49, %c0_50] : memref<400x64xbf16, #tpu.memory_space<vmem>>, vector<64x64xbf16>
    %c192_51 = arith.constant 192 : index
    %c64_52 = arith.constant 64 : index
    %35 = vector.load %arg11[%c192_51, %c64_52] : memref<256x256xbf16, #tpu.memory_space<vmem>>, vector<64x64xbf16>
    tpu.vector_store %arg11[%c192_51, %c64_52], %34 {strides = array<i32>} : memref<256x256xbf16, #tpu.memory_space<vmem>>, vector<64x64xbf16>,
    %c320 = arith.constant 320 : index
    %c0_53 = arith.constant 0 : index
    %36 = vector.load %arg10[%c320, %c0_53] : memref<400x64xbf16, #tpu.memory_space<vmem>>, vector<64x64xbf16>
    %c192_54 = arith.constant 192 : index
    %c128_55 = arith.constant 128 : index
    %37 = vector.load %arg11[%c192_54, %c128_55] : memref<256x256xbf16, #tpu.memory_space<vmem>>, vector<64x64xbf16>
    tpu.vector_store %arg11[%c192_54, %c128_55], %36 {strides = array<i32>} : memref<256x256xbf16, #tpu.memory_space<vmem>>, vector<64x64xbf16>,
    %c336 = arith.constant 336 : index
    %c0_56 = arith.constant 0 : index
    %38 = vector.load %arg10[%c336, %c0_56] : memref<400x64xbf16, #tpu.memory_space<vmem>>, vector<64x64xbf16>
    %c192_57 = arith.constant 192 : index
    %c192_58 = arith.constant 192 : index
    %39 = vector.load %arg11[%c192_57, %c192_58] : memref<256x256xbf16, #tpu.memory_space<vmem>>, vector<64x64xbf16>
    tpu.vector_store %arg11[%c192_57, %c192_58], %38 {strides = array<i32>} : memref<256x256xbf16, #tpu.memory_space<vmem>>, vector<64x64xbf16>,
    %c0_59 = arith.constant 0 : index
    %c0_60 = arith.constant 0 : index
    %40 = vector.load %arg11[%c0_59, %c0_60] : memref<256x256xbf16, #tpu.memory_space<vmem>>, vector<256x256xbf16>
    %c0_61 = arith.constant 0 : index
    %c0_62 = arith.constant 0 : index
    %41 = vector.load %arg3[%c0_61, %c0_62] : memref<256x32xbf16, #tpu.memory_space<vmem>>, vector<256x32xbf16>
    %cst_63 = arith.constant dense<0.000000e+00> : vector<256x32xf32>
    %42 = tpu.matmul %40, %41, %cst_63 {dimension_numbers = #tpu.dot_dimension_numbers<[1], [0], [0], [1], [0, 0, 1, 1], [], []>} : vector<256x256xbf16>, vector<256x32xbf16>, vector<256x32xf32> -> vector<256x32xf32>
    %c0_64 = arith.constant 0 : index
    %c0_65 = arith.constant 0 : index
    %43 = vector.load %arg4[%c0_64, %c0_65] : memref<1x32xf32, #tpu.memory_space<vmem>>, vector<1x32xf32>
    %44 = vector.broadcast %43 : vector<1x32xf32> to vector<256x32xf32>
    %45 = arith.addf %42, %44 : vector<256x32xf32>
    %cst_66 = arith.constant 0.000000e+00 : f32
    %46 = vector.broadcast %cst_66 : f32 to vector<256x32xf32>
    %47 = arith.maximumf %45, %46 : vector<256x32xf32>
    %48 = arith.truncf %47 : vector<256x32xf32> to vector<256x32xbf16>
    %c0_67 = arith.constant 0 : index
    %c0_68 = arith.constant 0 : index
    %49 = vector.load %arg12[%c0_67, %c0_68] : memref<256x32xbf16, #tpu.memory_space<vmem>>, vector<256x32xbf16>
    tpu.vector_store %arg12[%c0_67, %c0_68], %48 {strides = array<i32>} : memref<256x32xbf16, #tpu.memory_space<vmem>>, vector<256x32xbf16>,
    %c0_69 = arith.constant 0 : index
    %c0_70 = arith.constant 0 : index
    %50 = vector.load %arg12[%c0_69, %c0_70] : memref<256x32xbf16, #tpu.memory_space<vmem>>, vector<16x32xbf16>
    %c0_71 = arith.constant 0 : index
    %c0_72 = arith.constant 0 : index
    %51 = vector.load %arg13[%c0_71, %c0_72] : memref<16x512xbf16, #tpu.memory_space<vmem>>, vector<16x32xbf16>
    tpu.vector_store %arg13[%c0_71, %c0_72], %50 {strides = array<i32>} : memref<16x512xbf16, #tpu.memory_space<vmem>>, vector<16x32xbf16>,
    %c16_73 = arith.constant 16 : index
    %c0_74 = arith.constant 0 : index
    %52 = vector.load %arg12[%c16_73, %c0_74] : memref<256x32xbf16, #tpu.memory_space<vmem>>, vector<16x32xbf16>
    %c0_75 = arith.constant 0 : index
    %c32 = arith.constant 32 : index
    %53 = vector.load %arg13[%c0_75, %c32] : memref<16x512xbf16, #tpu.memory_space<vmem>>, vector<16x32xbf16>
    tpu.vector_store %arg13[%c0_75, %c32], %52 {strides = array<i32>} : memref<16x512xbf16, #tpu.memory_space<vmem>>, vector<16x32xbf16>,
    %c32_76 = arith.constant 32 : index
    %c0_77 = arith.constant 0 : index
    %54 = vector.load %arg12[%c32_76, %c0_77] : memref<256x32xbf16, #tpu.memory_space<vmem>>, vector<16x32xbf16>
    %c0_78 = arith.constant 0 : index
    %c64_79 = arith.constant 64 : index
    %55 = vector.load %arg13[%c0_78, %c64_79] : memref<16x512xbf16, #tpu.memory_space<vmem>>, vector<16x32xbf16>
    tpu.vector_store %arg13[%c0_78, %c64_79], %54 {strides = array<i32>} : memref<16x512xbf16, #tpu.memory_space<vmem>>, vector<16x32xbf16>,
    %c48 = arith.constant 48 : index
    %c0_80 = arith.constant 0 : index
    %56 = vector.load %arg12[%c48, %c0_80] : memref<256x32xbf16, #tpu.memory_space<vmem>>, vector<16x32xbf16>
    %c0_81 = arith.constant 0 : index
    %c96_82 = arith.constant 96 : index
    %57 = vector.load %arg13[%c0_81, %c96_82] : memref<16x512xbf16, #tpu.memory_space<vmem>>, vector<16x32xbf16>
    tpu.vector_store %arg13[%c0_81, %c96_82], %56 {strides = array<i32>} : memref<16x512xbf16, #tpu.memory_space<vmem>>, vector<16x32xbf16>,
    %c64_83 = arith.constant 64 : index
    %c0_84 = arith.constant 0 : index
    %58 = vector.load %arg12[%c64_83, %c0_84] : memref<256x32xbf16, #tpu.memory_space<vmem>>, vector<16x32xbf16>
    %c0_85 = arith.constant 0 : index
    %c128_86 = arith.constant 128 : index
    %59 = vector.load %arg13[%c0_85, %c128_86] : memref<16x512xbf16, #tpu.memory_space<vmem>>, vector<16x32xbf16>
    tpu.vector_store %arg13[%c0_85, %c128_86], %58 {strides = array<i32>} : memref<16x512xbf16, #tpu.memory_space<vmem>>, vector<16x32xbf16>,
    %c80_87 = arith.constant 80 : index
    %c0_88 = arith.constant 0 : index
    %60 = vector.load %arg12[%c80_87, %c0_88] : memref<256x32xbf16, #tpu.memory_space<vmem>>, vector<16x32xbf16>
    %c0_89 = arith.constant 0 : index
    %c160_90 = arith.constant 160 : index
    %61 = vector.load %arg13[%c0_89, %c160_90] : memref<16x512xbf16, #tpu.memory_space<vmem>>, vector<16x32xbf16>
    tpu.vector_store %arg13[%c0_89, %c160_90], %60 {strides = array<i32>} : memref<16x512xbf16, #tpu.memory_space<vmem>>, vector<16x32xbf16>,
    %c96_91 = arith.constant 96 : index
    %c0_92 = arith.constant 0 : index
    %62 = vector.load %arg12[%c96_91, %c0_92] : memref<256x32xbf16, #tpu.memory_space<vmem>>, vector<16x32xbf16>
    %c0_93 = arith.constant 0 : index
    %c192_94 = arith.constant 192 : index
    %63 = vector.load %arg13[%c0_93, %c192_94] : memref<16x512xbf16, #tpu.memory_space<vmem>>, vector<16x32xbf16>
    tpu.vector_store %arg13[%c0_93, %c192_94], %62 {strides = array<i32>} : memref<16x512xbf16, #tpu.memory_space<vmem>>, vector<16x32xbf16>,
    %c112 = arith.constant 112 : index
    %c0_95 = arith.constant 0 : index
    %64 = vector.load %arg12[%c112, %c0_95] : memref<256x32xbf16, #tpu.memory_space<vmem>>, vector<16x32xbf16>
    %c0_96 = arith.constant 0 : index
    %c224 = arith.constant 224 : index
    %65 = vector.load %arg13[%c0_96, %c224] : memref<16x512xbf16, #tpu.memory_space<vmem>>, vector<16x32xbf16>
    tpu.vector_store %arg13[%c0_96, %c224], %64 {strides = array<i32>} : memref<16x512xbf16, #tpu.memory_space<vmem>>, vector<16x32xbf16>,
    %c128_97 = arith.constant 128 : index
    %c0_98 = arith.constant 0 : index
    %66 = vector.load %arg12[%c128_97, %c0_98] : memref<256x32xbf16, #tpu.memory_space<vmem>>, vector<16x32xbf16>
    %c0_99 = arith.constant 0 : index
    %c256_100 = arith.constant 256 : index
    %67 = vector.load %arg13[%c0_99, %c256_100] : memref<16x512xbf16, #tpu.memory_space<vmem>>, vector<16x32xbf16>
    tpu.vector_store %arg13[%c0_99, %c256_100], %66 {strides = array<i32>} : memref<16x512xbf16, #tpu.memory_space<vmem>>, vector<16x32xbf16>,
    %c144 = arith.constant 144 : index
    %c0_101 = arith.constant 0 : index
    %68 = vector.load %arg12[%c144, %c0_101] : memref<256x32xbf16, #tpu.memory_space<vmem>>, vector<16x32xbf16>
    %c0_102 = arith.constant 0 : index
    %c288 = arith.constant 288 : index
    %69 = vector.load %arg13[%c0_102, %c288] : memref<16x512xbf16, #tpu.memory_space<vmem>>, vector<16x32xbf16>
    tpu.vector_store %arg13[%c0_102, %c288], %68 {strides = array<i32>} : memref<16x512xbf16, #tpu.memory_space<vmem>>, vector<16x32xbf16>,
    %c160_103 = arith.constant 160 : index
    %c0_104 = arith.constant 0 : index
    %70 = vector.load %arg12[%c160_103, %c0_104] : memref<256x32xbf16, #tpu.memory_space<vmem>>, vector<16x32xbf16>
    %c0_105 = arith.constant 0 : index
    %c320_106 = arith.constant 320 : index
    %71 = vector.load %arg13[%c0_105, %c320_106] : memref<16x512xbf16, #tpu.memory_space<vmem>>, vector<16x32xbf16>
    tpu.vector_store %arg13[%c0_105, %c320_106], %70 {strides = array<i32>} : memref<16x512xbf16, #tpu.memory_space<vmem>>, vector<16x32xbf16>,
    %c176_107 = arith.constant 176 : index
    %c0_108 = arith.constant 0 : index
    %72 = vector.load %arg12[%c176_107, %c0_108] : memref<256x32xbf16, #tpu.memory_space<vmem>>, vector<16x32xbf16>
    %c0_109 = arith.constant 0 : index
    %c352 = arith.constant 352 : index
    %73 = vector.load %arg13[%c0_109, %c352] : memref<16x512xbf16, #tpu.memory_space<vmem>>, vector<16x32xbf16>
    tpu.vector_store %arg13[%c0_109, %c352], %72 {strides = array<i32>} : memref<16x512xbf16, #tpu.memory_space<vmem>>, vector<16x32xbf16>,
    %c192_110 = arith.constant 192 : index
    %c0_111 = arith.constant 0 : index
    %74 = vector.load %arg12[%c192_110, %c0_111] : memref<256x32xbf16, #tpu.memory_space<vmem>>, vector<16x32xbf16>
    %c0_112 = arith.constant 0 : index
    %c384 = arith.constant 384 : index
    %75 = vector.load %arg13[%c0_112, %c384] : memref<16x512xbf16, #tpu.memory_space<vmem>>, vector<16x32xbf16>
    tpu.vector_store %arg13[%c0_112, %c384], %74 {strides = array<i32>} : memref<16x512xbf16, #tpu.memory_space<vmem>>, vector<16x32xbf16>,
    %c208 = arith.constant 208 : index
    %c0_113 = arith.constant 0 : index
    %76 = vector.load %arg12[%c208, %c0_113] : memref<256x32xbf16, #tpu.memory_space<vmem>>, vector<16x32xbf16>
    %c0_114 = arith.constant 0 : index
    %c416 = arith.constant 416 : index
    %77 = vector.load %arg13[%c0_114, %c416] : memref<16x512xbf16, #tpu.memory_space<vmem>>, vector<16x32xbf16>
    tpu.vector_store %arg13[%c0_114, %c416], %76 {strides = array<i32>} : memref<16x512xbf16, #tpu.memory_space<vmem>>, vector<16x32xbf16>,
    %c224_115 = arith.constant 224 : index
    %c0_116 = arith.constant 0 : index
    %78 = vector.load %arg12[%c224_115, %c0_116] : memref<256x32xbf16, #tpu.memory_space<vmem>>, vector<16x32xbf16>
    %c0_117 = arith.constant 0 : index
    %c448 = arith.constant 448 : index
    %79 = vector.load %arg13[%c0_117, %c448] : memref<16x512xbf16, #tpu.memory_space<vmem>>, vector<16x32xbf16>
    tpu.vector_store %arg13[%c0_117, %c448], %78 {strides = array<i32>} : memref<16x512xbf16, #tpu.memory_space<vmem>>, vector<16x32xbf16>,
    %c240_118 = arith.constant 240 : index
    %c0_119 = arith.constant 0 : index
    %80 = vector.load %arg12[%c240_118, %c0_119] : memref<256x32xbf16, #tpu.memory_space<vmem>>, vector<16x32xbf16>
    %c0_120 = arith.constant 0 : index
    %c480 = arith.constant 480 : index
    %81 = vector.load %arg13[%c0_120, %c480] : memref<16x512xbf16, #tpu.memory_space<vmem>>, vector<16x32xbf16>
    tpu.vector_store %arg13[%c0_120, %c480], %80 {strides = array<i32>} : memref<16x512xbf16, #tpu.memory_space<vmem>>, vector<16x32xbf16>,
    %c0_121 = arith.constant 0 : index
    %c0_122 = arith.constant 0 : index
    %82 = vector.load %arg13[%c0_121, %c0_122] : memref<16x512xbf16, #tpu.memory_space<vmem>>, vector<16x512xbf16>
    %c0_123 = arith.constant 0 : index
    %c0_124 = arith.constant 0 : index
    %83 = vector.load %arg5[%c0_123, %c0_124] : memref<512x64xbf16, #tpu.memory_space<vmem>>, vector<512x64xbf16>
    %cst_125 = arith.constant dense<0.000000e+00> : vector<16x64xf32>
    %84 = tpu.matmul %82, %83, %cst_125 {dimension_numbers = #tpu.dot_dimension_numbers<[1], [0], [0], [1], [0, 0, 1, 1], [], []>} : vector<16x512xbf16>, vector<512x64xbf16>, vector<16x64xf32> -> vector<16x64xf32>
    %c0_126 = arith.constant 0 : index
    %c0_127 = arith.constant 0 : index
    %85 = vector.load %arg6[%c0_126, %c0_127] : memref<1x64xf32, #tpu.memory_space<vmem>>, vector<1x64xf32>
    %86 = vector.broadcast %85 : vector<1x64xf32> to vector<16x64xf32>
    %87 = arith.addf %84, %86 : vector<16x64xf32>
    %cst_128 = arith.constant 0.000000e+00 : f32
    %88 = vector.broadcast %cst_128 : f32 to vector<16x64xf32>
    %89 = arith.maximumf %87, %88 : vector<16x64xf32>
    %90 = arith.truncf %89 : vector<16x64xf32> to vector<16x64xbf16>
    %c0_129 = arith.constant 0 : index
    %c0_130 = arith.constant 0 : index
    %91 = vector.load %arg7[%c0_129, %c0_130] : memref<64x8xbf16, #tpu.memory_space<vmem>>, vector<64x8xbf16>
    %cst_131 = arith.constant dense<0.000000e+00> : vector<16x8xf32>
    %92 = tpu.matmul %90, %91, %cst_131 {dimension_numbers = #tpu.dot_dimension_numbers<[1], [0], [0], [1], [0, 0, 1, 1], [], []>} : vector<16x64xbf16>, vector<64x8xbf16>, vector<16x8xf32> -> vector<16x8xf32>
    %c0_132 = arith.constant 0 : index
    %c0_133 = arith.constant 0 : index
    %93 = vector.load %arg8[%c0_132, %c0_133] : memref<1x8xf32, #tpu.memory_space<vmem>>, vector<1x8xf32>
    %94 = vector.broadcast %93 : vector<1x8xf32> to vector<16x8xf32>
    %95 = arith.addf %92, %94 : vector<16x8xf32>
    %c0_134 = arith.constant 0 : index
    %c0_135 = arith.constant 0 : index
    %96 = vector.load %arg9[%c0_134, %c0_135] : memref<16x8xf32, #tpu.memory_space<vmem>>, vector<16x8xf32>
    tpu.vector_store %arg9[%c0_134, %c0_135], %95 {strides = array<i32>} : memref<16x8xf32, #tpu.memory_space<vmem>>, vector<16x8xf32>,
    return
  }
  func.func @transform_0(%arg0: i32) -> (i32, i32, i32) {
    %c0_i32 = arith.constant 0 : i32
    %c0_i32_0 = arith.constant 0 : i32
    %c0_i32_1 = arith.constant 0 : i32
    return %arg0, %c0_i32, %c0_i32_0 : i32, i32, i32
  }
  func.func @transform_1(%arg0: i32) -> (i32, i32) {
    %c0_i32 = arith.constant 0 : i32
    %c0_i32_0 = arith.constant 0 : i32
    %c0_i32_1 = arith.constant 0 : i32
    return %c0_i32, %c0_i32_0 : i32, i32
  }
  func.func @transform_2(%arg0: i32) -> (i32, i32) {
    %c0_i32 = arith.constant 0 : i32
    %c0_i32_0 = arith.constant 0 : i32
    %c0_i32_1 = arith.constant 0 : i32
    return %c0_i32, %c0_i32_0 : i32, i32
  }
  func.func @transform_3(%arg0: i32) -> (i32, i32) {
    %c0_i32 = arith.constant 0 : i32
    %c0_i32_0 = arith.constant 0 : i32
    %c0_i32_1 = arith.constant 0 : i32
    return %c0_i32, %c0_i32_0 : i32, i32
  }
  func.func @transform_4(%arg0: i32) -> (i32, i32) {
    %c0_i32 = arith.constant 0 : i32
    %c0_i32_0 = arith.constant 0 : i32
    %c0_i32_1 = arith.constant 0 : i32
    return %c0_i32, %c0_i32_0 : i32, i32
  }
  func.func @transform_5(%arg0: i32) -> (i32, i32) {
    %c0_i32 = arith.constant 0 : i32
    %c0_i32_0 = arith.constant 0 : i32
    %c0_i32_1 = arith.constant 0 : i32
    return %c0_i32, %c0_i32_0 : i32, i32
  }
  func.func @transform_6(%arg0: i32) -> (i32, i32) {
    %c0_i32 = arith.constant 0 : i32
    %c0_i32_0 = arith.constant 0 : i32
    %c0_i32_1 = arith.constant 0 : i32
    return %c0_i32, %c0_i32_0 : i32, i32
  }
  func.func @transform_7(%arg0: i32) -> (i32, i32) {
    %c0_i32 = arith.constant 0 : i32
    %c0_i32_0 = arith.constant 0 : i32
    %c0_i32_1 = arith.constant 0 : i32
    return %c0_i32, %c0_i32_0 : i32, i32
  }
  func.func @transform_8(%arg0: i32) -> (i32, i32) {
    %c0_i32 = arith.constant 0 : i32
    %c0_i32_0 = arith.constant 0 : i32
    return %arg0, %c0_i32 : i32, i32
  }
}

</mosaic_0001>

<llo_original>
// kernel: qnet_forward.1
$region0: #{qnet_forward.1}
  #allocation0 [shape = 'u32[]', space=smem, size = 0x4, offset = 0x4, fixed_abs, tag = 'smem constant byte address 0x4 - core index']
  #allocation1 [shape = 'u32[144,128]{1,0:T(1,128)}', space=vmem, size = 0x12000, scoped, tag = 'internal scratch']
  #allocation2 [shape = 'bf16[400,64]{1,0:T(16,128)(2,1)}', space=vmem, size = 0x19000, scoped, tag = 'scratch operand']
  #allocation3 [shape = 'bf16[256,256]{1,0:T(16,128)(2,1)}', space=vmem, size = 0x20000, scoped, tag = 'scratch operand']
  #allocation4 [shape = 'bf16[256,32]{1,0:T(16,128)(2,1)}', space=vmem, size = 0x10000, scoped, tag = 'scratch operand']
  #allocation5 [shape = 'bf16[16,512]{1,0:T(16,128)(2,1)}', space=vmem, size = 0x4000, scoped, tag = 'scratch operand']
  %s0 = inlined_call_operand.vmem [shape: bf16[1,400,148], index: 0, kind: input, shape index: {}]
  %s1 = inlined_call_operand.vmem [shape: bf16[148,64], index: 1, kind: input, shape index: {}]
  %s2 = inlined_call_operand.vmem [shape: bf16[256,32], index: 2, kind: input, shape index: {}]
  %s3 = inlined_call_operand.vmem [shape: f32[1,32], index: 3, kind: input, shape index: {}]
  %s4 = inlined_call_operand.vmem [shape: bf16[512,64], index: 4, kind: input, shape index: {}]
  %s5 = inlined_call_operand.vmem [shape: f32[1,64], index: 5, kind: input, shape index: {}]
  %s6 = inlined_call_operand.vmem [shape: bf16[64,8], index: 6, kind: input, shape index: {}]
  %s7 = inlined_call_operand.vmem [shape: f32[1,8], index: 7, kind: input, shape index: {}]
  %s8 = inlined_call_operand.vmem [shape: f32[16,8], index: 8, kind: output, shape index: {}]
  %s9 = sld [smem:[#allocation0]]
  $region42: #{qnet_forward.1} parent=0
    _
  %s11 = ssub.s32 1, %s9
  %s12 = scalar_select 0, %s11, %s9
  // Predicated region
  $region2: #{qnet_forward.1} parent=0 // pred_check
    _
  $region3: #{qnet_forward.1} parent=0 // pred_check_branch
    %14 = sbr.rel (0) target = $region5
  $region4: #{qnet_forward.1} parent=0 // pred_region
    _
  $region5: #{qnet_forward.1} parent=0 // pred_fallthru
    _
  // Predicated region
  $region6: #{qnet_forward.1} parent=0 // pred_check
    _
  $region7: #{qnet_forward.1} parent=0 // pred_check_branch
    %16 = sbr.rel (0) target = $region9
  $region8: #{qnet_forward.1} parent=0 // pred_region
    _
  $region9: #{qnet_forward.1} parent=0 // pred_fallthru
    _
  // Predicated region
  $region10: #{qnet_forward.1} parent=0 // pred_check
    _
  $region11: #{qnet_forward.1} parent=0 // pred_check_branch
    %18 = sbr.rel (0) target = $region13
  $region12: #{qnet_forward.1} parent=0 // pred_region
    _
  $region13: #{qnet_forward.1} parent=0 // pred_fallthru
    _
  // Predicated region
  $region14: #{qnet_forward.1} parent=0 // pred_check
    _
  $region15: #{qnet_forward.1} parent=0 // pred_check_branch
    %20 = sbr.rel (0) target = $region17
  $region16: #{qnet_forward.1} parent=0 // pred_region
    _
  $region17: #{qnet_forward.1} parent=0 // pred_fallthru
    _
  // Predicated region
  $region18: #{qnet_forward.1} parent=0 // pred_check
    _
  $region19: #{qnet_forward.1} parent=0 // pred_check_branch
    %22 = sbr.rel (0) target = $region21
  $region20: #{qnet_forward.1} parent=0 // pred_region
    _
  $region21: #{qnet_forward.1} parent=0 // pred_fallthru
    _
  // Predicated region
  $region22: #{qnet_forward.1} parent=0 // pred_check
    _
  $region23: #{qnet_forward.1} parent=0 // pred_check_branch
    %24 = sbr.rel (0) target = $region25
  $region24: #{qnet_forward.1} parent=0 // pred_region
    _
  $region25: #{qnet_forward.1} parent=0 // pred_fallthru
    _
  // Predicated region
  $region26: #{qnet_forward.1} parent=0 // pred_check
    _
  $region27: #{qnet_forward.1} parent=0 // pred_check_branch
    %26 = sbr.rel (0) target = $region29
  $region28: #{qnet_forward.1} parent=0 // pred_region
    _
  $region29: #{qnet_forward.1} parent=0 // pred_fallthru
    _
  // Predicated region
  $region30: #{qnet_forward.1} parent=0 // pred_check
    _
  $region31: #{qnet_forward.1} parent=0 // pred_check_branch
    %28 = sbr.rel (0) target = $region33
  $region32: #{qnet_forward.1} parent=0 // pred_region
    _
  $region33: #{qnet_forward.1} parent=0 // pred_fallthru
    _
  %v30 = vld [vmem:[%s0] sm:$0xff]
  %v31 = vld [vmem:[%s0 + $0x8] sm:$0xff]
  %v32 = vld [vmem:[%s0 + $0x10] sm:$0xff]
  %v33 = vld [vmem:[%s0 + $0x18] sm:$0xff]
  %v34 = vld [vmem:[%s0 + $0x20] sm:$0xff]
  %v35 = vld [vmem:[%s0 + $0x28] sm:$0xff]
  %v36 = vld [vmem:[%s0 + $0x30] sm:$0xff]
  %v37 = vld [vmem:[%s0 + $0x38] sm:$0xff]
  %v38 = vld [vmem:[%s0 + $0x40] sm:$0xff]
  %v39 = vld [vmem:[%s0 + $0x48] sm:$0xff]
  %v40 = vld [vmem:[%s0 + $0x50] sm:$0xff]
  %v41 = vld [vmem:[%s0 + $0x58] sm:$0xff]
  %v42 = vld [vmem:[%s0 + $0x60] sm:$0xff]
  %v43 = vld [vmem:[%s0 + $0x68] sm:$0xff]
  %v44 = vld [vmem:[%s0 + $0x70] sm:$0xff]
  %v45 = vld [vmem:[%s0 + $0x78] sm:$0xff]
  %v46 = vld [vmem:[%s0 + $0x80] sm:$0xff]
  %v47 = vld [vmem:[%s0 + $0x88] sm:$0xff]
  %v48 = vld [vmem:[%s0 + $0x90] sm:$0xff]
  %v49 = vld [vmem:[%s0 + $0x98] sm:$0xff]
  %v50 = vld [vmem:[%s0 + $0xa0] sm:$0xff]
  %v51 = vld [vmem:[%s0 + $0xa8] sm:$0xff]
  %v52 = vld [vmem:[%s0 + $0xb0] sm:$0xff]
  %v53 = vld [vmem:[%s0 + $0xb8] sm:$0xff]
  %v54 = vld [vmem:[%s0 + $0xc0] sm:$0xff]
  %v55 = vld [vmem:[%s0 + $0xc8] sm:$0xff]
  %v56 = vld [vmem:[%s0 + $0xd0] sm:$0xff]
  %v57 = vld [vmem:[%s0 + $0xd8] sm:$0xff]
  %v58 = vld [vmem:[%s0 + $0xe0] sm:$0xff]
  %v59 = vld [vmem:[%s0 + $0xe8] sm:$0xff]
  %v60 = vld [vmem:[%s0 + $0xf0] sm:$0xff]
  %v61 = vld [vmem:[%s0 + $0xf8] sm:$0xff]
  %v62 = vld [vmem:[%s0 + $0x100] sm:$0xff]
  %v63 = vld [vmem:[%s0 + $0x108] sm:$0xff]
  %v64 = vld [vmem:[%s0 + $0x110] sm:$0xff]
  %v65 = vld [vmem:[%s0 + $0x118] sm:$0xff]
  %v66 = vld [vmem:[%s0 + $0x120] sm:$0xff]
  %v67 = vld [vmem:[%s0 + $0x128] sm:$0xff]
  %v68 = vld [vmem:[%s0 + $0x130] sm:$0xff]
  %v69 = vld [vmem:[%s0 + $0x138] sm:$0xff]
  %v70 = vld [vmem:[%s0 + $0x140] sm:$0xff]
  %v71 = vld [vmem:[%s0 + $0x148] sm:$0xff]
  %v72 = vld [vmem:[%s0 + $0x150] sm:$0xff]
  %v73 = vld [vmem:[%s0 + $0x158] sm:$0xff]
  %v74 = vld [vmem:[%s0 + $0x160] sm:$0xff]
  %v75 = vld [vmem:[%s0 + $0x168] sm:$0xff]
  %v76 = vld [vmem:[%s0 + $0x170] sm:$0xff]
  %v77 = vld [vmem:[%s0 + $0x178] sm:$0xff]
  %v78 = vld [vmem:[%s0 + $0x180] sm:$0xff]
  %v79 = vld [vmem:[%s0 + $0x188] sm:$0xff]
  %v80 = vld [vmem:[%s1] sm:$0xf]
  %v81 = vld [vmem:[%s1 + $0x4] sm:$0xf]
  %v82 = vld [vmem:[%s1 + $0x8] sm:$0xf]
  %v83 = vld [vmem:[%s1 + $0xc] sm:$0xf]
  %v84 = vld [vmem:[%s1 + $0x10] sm:$0xf]
  %v85 = vld [vmem:[%s1 + $0x14] sm:$0xf]
  %v86 = vld [vmem:[%s1 + $0x18] sm:$0xf]
  %v87 = vld [vmem:[%s1 + $0x1c] sm:$0xf]
  %v88 = vld [vmem:[%s1 + $0x20] sm:$0xf]
  %v89 = vld [vmem:[%s1 + $0x24] sm:$0xf]
  %v90 = vld [vmem:[%s1 + $0x28] sm:$0xf]
  %v91 = vld [vmem:[%s1 + $0x2c] sm:$0xf]
  %v92 = vld [vmem:[%s1 + $0x30] sm:$0xf]
  %v93 = vld [vmem:[%s1 + $0x34] sm:$0xf]
  %v94 = vld [vmem:[%s1 + $0x38] sm:$0xf]
  %v95 = vld [vmem:[%s1 + $0x3c] sm:$0xf]
  %v96 = vld [vmem:[%s1 + $0x40] sm:$0xf]
  %v97 = vld [vmem:[%s1 + $0x44] sm:$0xf]
  %v98 = vld [vmem:[%s1 + $0x48] sm:$0x3]
  %v149 = vunpack.c.l.b16 %v30
  %v150 = vunpack.c.h.b16 %v30
  %v151 = vunpack.c.l.b16 %v31
  %v152 = vunpack.c.h.b16 %v31
  %v153 = vunpack.c.l.b16 %v32
  %v154 = vunpack.c.h.b16 %v32
  %v155 = vunpack.c.l.b16 %v33
  %v156 = vunpack.c.h.b16 %v33
  %v157 = vunpack.c.l.b16 %v34
  %v158 = vunpack.c.h.b16 %v34
  %v159 = vunpack.c.l.b16 %v35
  %v160 = vunpack.c.h.b16 %v35
  %v161 = vunpack.c.l.b16 %v36
  %v162 = vunpack.c.h.b16 %v36
  %v163 = vunpack.c.l.b16 %v37
  %v164 = vunpack.c.h.b16 %v37
  %v165 = vunpack.c.l.b16 %v38
  %v166 = vunpack.c.h.b16 %v38
  %v167 = vunpack.c.l.b16 %v39
  %v168 = vunpack.c.h.b16 %v39
  %v169 = vunpack.c.l.b16 %v40
  %v170 = vunpack.c.h.b16 %v40
  %v171 = vunpack.c.l.b16 %v41
  %v172 = vunpack.c.h.b16 %v41
  %v173 = vunpack.c.l.b16 %v42
  %v174 = vunpack.c.h.b16 %v42
  %v175 = vunpack.c.l.b16 %v43
  %v176 = vunpack.c.h.b16 %v43
  %v177 = vunpack.c.l.b16 %v44
  %v178 = vunpack.c.h.b16 %v44
  %v179 = vunpack.c.l.b16 %v45
  %v180 = vunpack.c.h.b16 %v45
  %v181 = vunpack.c.l.b16 %v46
  %v182 = vunpack.c.h.b16 %v46
  %v183 = vunpack.c.l.b16 %v47
  %v184 = vunpack.c.h.b16 %v47
  %v185 = vunpack.c.l.b16 %v48
  %v186 = vunpack.c.h.b16 %v48
  %v187 = vunpack.c.l.b16 %v49
  %v188 = vunpack.c.h.b16 %v49
  %v189 = vunpack.c.l.b16 %v50
  %v190 = vunpack.c.h.b16 %v50
  %v191 = vunpack.c.l.b16 %v51
  %v192 = vunpack.c.h.b16 %v51
  %v193 = vunpack.c.l.b16 %v52
  %v194 = vunpack.c.h.b16 %v52
  %v195 = vunpack.c.l.b16 %v53
  %v196 = vunpack.c.h.b16 %v53
  %v197 = vunpack.c.l.b16 %v54
  %v198 = vunpack.c.h.b16 %v54
  %v199 = vunpack.c.l.b16 %v55
  %v200 = vunpack.c.h.b16 %v55
  %v201 = vunpack.c.l.b16 %v56
  %v202 = vunpack.c.h.b16 %v56
  %v203 = vunpack.c.l.b16 %v57
  %v204 = vunpack.c.h.b16 %v57
  %v205 = vunpack.c.l.b16 %v58
  %v206 = vunpack.c.h.b16 %v58
  %v207 = vunpack.c.l.b16 %v59
  %v208 = vunpack.c.h.b16 %v59
  %v209 = vunpack.c.l.b16 %v60
  %v210 = vunpack.c.h.b16 %v60
  %v211 = vunpack.c.l.b16 %v61
  %v212 = vunpack.c.h.b16 %v61
  %v213 = vunpack.c.l.b16 %v62
  %v214 = vunpack.c.h.b16 %v62
  %v215 = vunpack.c.l.b16 %v63
  %v216 = vunpack.c.h.b16 %v63
  %v217 = vunpack.c.l.b16 %v64
  %v218 = vunpack.c.h.b16 %v64
  %v219 = vunpack.c.l.b16 %v65
  %v220 = vunpack.c.h.b16 %v65
  %v221 = vunpack.c.l.b16 %v66
  %v222 = vunpack.c.h.b16 %v66
  %v223 = vunpack.c.l.b16 %v67
  %v224 = vunpack.c.h.b16 %v67
  %v225 = vunpack.c.l.b16 %v68
  %v226 = vunpack.c.h.b16 %v68
  %v227 = vunpack.c.l.b16 %v69
  %v228 = vunpack.c.h.b16 %v69
  %v229 = vunpack.c.l.b16 %v70
  %v230 = vunpack.c.h.b16 %v70
  %v231 = vunpack.c.l.b16 %v71
  %v232 = vunpack.c.h.b16 %v71
  %v233 = vunpack.c.l.b16 %v72
  %v234 = vunpack.c.h.b16 %v72
  %v235 = vunpack.c.l.b16 %v73
  %v236 = vunpack.c.h.b16 %v73
  %v237 = vunpack.c.l.b16 %v74
  %v238 = vunpack.c.h.b16 %v74
  %v239 = vunpack.c.l.b16 %v75
  %v240 = vunpack.c.h.b16 %v75
  %v241 = vunpack.c.l.b16 %v76
  %v242 = vunpack.c.h.b16 %v76
  %v243 = vunpack.c.l.b16 %v77
  %v244 = vunpack.c.h.b16 %v77
  %v245 = vunpack.c.l.b16 %v78
  %v246 = vunpack.c.h.b16 %v78
  %v247 = vunpack.c.l.b16 %v79
  %v248 = vunpack.c.h.b16 %v79
  %v249 = vpack.c.b16 %v151, %v149
  %v250 = vpack.c.b16 %v152, %v150
  %v251 = vpack.c.b16 %v155, %v153
  %v252 = vpack.c.b16 %v156, %v154
  %v253 = vpack.c.b16 %v159, %v157
  %v254 = vpack.c.b16 %v160, %v158
  %v255 = vpack.c.b16 %v163, %v161
  %v256 = vpack.c.b16 %v164, %v162
  %v257 = vpack.c.b16 %v167, %v165
  %v258 = vpack.c.b16 %v168, %v166
  %v259 = vpack.c.b16 %v171, %v169
  %v260 = vpack.c.b16 %v172, %v170
  %v261 = vpack.c.b16 %v175, %v173
  %v262 = vpack.c.b16 %v176, %v174
  %v263 = vpack.c.b16 %v179, %v177
  %v264 = vpack.c.b16 %v180, %v178
  %v265 = vpack.c.b16 %v183, %v181
  %v266 = vpack.c.b16 %v184, %v182
  %v267 = vpack.c.b16 %v187, %v185
  %v268 = vpack.c.b16 %v188, %v186
  %v269 = vpack.c.b16 %v191, %v189
  %v270 = vpack.c.b16 %v192, %v190
  %v271 = vpack.c.b16 %v195, %v193
  %v272 = vpack.c.b16 %v196, %v194
  %v273 = vpack.c.b16 %v199, %v197
  %v274 = vpack.c.b16 %v200, %v198
  %v275 = vpack.c.b16 %v203, %v201
  %v276 = vpack.c.b16 %v204, %v202
  %v277 = vpack.c.b16 %v207, %v205
  %v278 = vpack.c.b16 %v208, %v206
  %v279 = vpack.c.b16 %v211, %v209
  %v280 = vpack.c.b16 %v212, %v210
  %v281 = vpack.c.b16 %v215, %v213
  %v282 = vpack.c.b16 %v216, %v214
  %v283 = vpack.c.b16 %v219, %v217
  %v284 = vpack.c.b16 %v220, %v218
  %v285 = vpack.c.b16 %v223, %v221
  %v286 = vpack.c.b16 %v224, %v222
  %v287 = vpack.c.b16 %v227, %v225
  %v288 = vpack.c.b16 %v228, %v226
  %v289 = vpack.c.b16 %v231, %v229
  %v290 = vpack.c.b16 %v232, %v230
  %v291 = vpack.c.b16 %v235, %v233
  %v292 = vpack.c.b16 %v236, %v234
  %v293 = vpack.c.b16 %v239, %v237
  %v294 = vpack.c.b16 %v240, %v238
  %v295 = vpack.c.b16 %v243, %v241
  %v296 = vpack.c.b16 %v244, %v242
  %v297 = vpack.c.b16 %v247, %v245
  %v298 = vpack.c.b16 %v248, %v246
  %v343 = vunpack.c.l.b16 %v80
  %v344 = vunpack.c.l.b16 %v81
  %v345 = vunpack.c.l.b16 %v82
  %v346 = vunpack.c.l.b16 %v83
  %v347 = vunpack.c.l.b16 %v84
  %v348 = vunpack.c.l.b16 %v85
  %v349 = vunpack.c.l.b16 %v86
  %v350 = vunpack.c.l.b16 %v87
  %v351 = vunpack.c.l.b16 %v88
  %v352 = vunpack.c.l.b16 %v89
  %v353 = vunpack.c.l.b16 %v90
  %v354 = vunpack.c.l.b16 %v91
  %v355 = vunpack.c.l.b16 %v92
  %v356 = vunpack.c.l.b16 %v93
  %v357 = vunpack.c.l.b16 %v94
  %v358 = vunpack.c.l.b16 %v95
  %v359 = vunpack.c.l.b16 %v96
  %v360 = vunpack.c.l.b16 %v97
  %v361 = vunpack.c.l.b16 %v98
  %v362 = vpack.c.b16 %v344, %v343
  %v363 = vpack.c.b16 %v346, %v345
  %v364 = vpack.c.b16 %v348, %v347
  %v365 = vpack.c.b16 %v350, %v349
  %v366 = vpack.c.b16 %v352, %v351
  %v367 = vpack.c.b16 %v354, %v353
  %v368 = vpack.c.b16 %v356, %v355
  %v369 = vpack.c.b16 %v358, %v357
  %v370 = vpack.c.b16 %v360, %v359
  %v371 = vpack.c.b16 %v361, %v361
  %vm381 = vcmask 162816
  %v383 = vsel %vm381, %v250, 0
  %v386 = vsel %vm381, %v252, 0
  %v389 = vsel %vm381, %v254, 0
  %v392 = vsel %vm381, %v256, 0
  %v395 = vsel %vm381, %v258, 0
  %v398 = vsel %vm381, %v260, 0
  %v401 = vsel %vm381, %v262, 0
  %v404 = vsel %vm381, %v264, 0
  %v407 = vsel %vm381, %v266, 0
  %v410 = vsel %vm381, %v268, 0
  %v413 = vsel %vm381, %v270, 0
  %v416 = vsel %vm381, %v272, 0
  %v419 = vsel %vm381, %v274, 0
  %v422 = vsel %vm381, %v276, 0
  %v425 = vsel %vm381, %v278, 0
  %v428 = vsel %vm381, %v280, 0
  %v431 = vsel %vm381, %v282, 0
  %v434 = vsel %vm381, %v284, 0
  %v437 = vsel %vm381, %v286, 0
  %v440 = vsel %vm381, %v288, 0
  %v443 = vsel %vm381, %v290, 0
  %v446 = vsel %vm381, %v292, 0
  %v449 = vsel %vm381, %v294, 0
  %v452 = vsel %vm381, %v296, 0
  %v455 = vsel %vm381, %v298, 0
  %vm457 = vcmask 1041408
  %v459 = vsel %vm457, %v371, 0
  %461 = vmatprep.subr.bf16.mxu0 0
  %462 = vmatpush1.bf16.msra.mxu0 %v362
  %463 = vmatprep.subr.bf16.mxu0 0
  %464 = vmatpush1.bf16.msra.mxu0 %v363
  %465 = vmatprep.subr.bf16.mxu0 0
  %466 = vmatpush1.bf16.msra.mxu0 %v364
  %467 = vmatprep.subr.bf16.mxu0 0
  %468 = vmatpush1.bf16.msra.mxu0 %v365
  %469 = vmatprep.subr.bf16.mxu0 0
  %470 = vmatpush1.bf16.msra.mxu0 %v366
  %471 = vmatprep.subr.bf16.mxu0 0
  %472 = vmatpush1.bf16.msra.mxu0 %v367
  %473 = vmatprep.subr.bf16.mxu0 0
  %474 = vmatpush1.bf16.msra.mxu0 %v368
  %475 = vmatprep.subr.bf16.mxu0 0
  %476 = vmatpush1.bf16.msra.mxu0 %v369
  %477 = vmatprep.subr.bf16.mxu0 0
  %478 = vmatpush1.bf16.msra.mxu0 %v370
  %479 = vmatprep.subr.bf16.mxu0 0
  %480 = vmatpush1.bf16.msra.mxu0 %v459
  %481 = vmatprep.subr.bf16.mxu0 0
  %482 = vmatpush1.bf16.msra.mxu0 0
  %483 = vmatprep.subr.bf16.mxu0 0
  %484 = vmatpush1.bf16.msra.mxu0 0
  %485 = vmatprep.subr.bf16.mxu0 0
  %486 = vmatpush1.bf16.msra.mxu0 0
  %487 = vmatprep.subr.bf16.mxu0 0
  %488 = vmatpush1.bf16.msra.mxu0 0
  %489 = vmatprep.subr.bf16.mxu0 0
  %490 = vmatpush1.bf16.msra.mxu0 0
  %491 = vmatprep.subr.bf16.mxu0 0
  %492 = vmatpush1.bf16.msra.mxu0 0
  %493 = vmatprep.mubr.bf16.mxu0 %v383
  %494 = vmatmul.mubr.bf16.gmra.mrb[0].mxu0 %v249
  %v495 = vpop.f32.mrb[0].mxu0
  %v496 = vadd.f32 0.0, %v495
  %v497 = vpop.f32.mrb[0].mxu0
  %v498 = vpop.f32.mrb[0].mxu0
  %v499 = vadd.f32 0.0, %v498
  %v500 = vpop.f32.mrb[0].mxu0
  %501 = vmatprep.mubr.bf16.mxu0 %v386
  %502 = vmatmul.mubr.bf16.gmra.mrb[0].mxu0 %v251
  %v503 = vpop.f32.mrb[0].mxu0
  %v504 = vadd.f32 0.0, %v503
  %v505 = vpop.f32.mrb[0].mxu0
  %v506 = vpop.f32.mrb[0].mxu0
  %v507 = vadd.f32 0.0, %v506
  %v508 = vpop.f32.mrb[0].mxu0
  %509 = vmatprep.mubr.bf16.mxu0 %v389
  %510 = vmatmul.mubr.bf16.gmra.mrb[0].mxu0 %v253
  %v511 = vpop.f32.mrb[0].mxu0
  %v512 = vadd.f32 0.0, %v511
  %v513 = vpop.f32.mrb[0].mxu0
  %v514 = vpop.f32.mrb[0].mxu0
  %v515 = vadd.f32 0.0, %v514
  %v516 = vpop.f32.mrb[0].mxu0
  %517 = vmatprep.mubr.bf16.mxu0 %v392
  %518 = vmatmul.mubr.bf16.gmra.mrb[0].mxu0 %v255
  %v519 = vpop.f32.mrb[0].mxu0
  %v520 = vadd.f32 0.0, %v519
  %v521 = vpop.f32.mrb[0].mxu0
  %v522 = vpop.f32.mrb[0].mxu0
  %v523 = vadd.f32 0.0, %v522
  %v524 = vpop.f32.mrb[0].mxu0
  %525 = vmatprep.mubr.bf16.mxu0 %v395
  %526 = vmatmul.mubr.bf16.gmra.mrb[0].mxu0 %v257
  %v527 = vpop.f32.mrb[0].mxu0
  %v528 = vadd.f32 0.0, %v527
  %v529 = vpop.f32.mrb[0].mxu0
  %v530 = vpop.f32.mrb[0].mxu0
  %v531 = vadd.f32 0.0, %v530
  %v532 = vpop.f32.mrb[0].mxu0
  %533 = vmatprep.mubr.bf16.mxu0 %v398
  %534 = vmatmul.mubr.bf16.gmra.mrb[0].mxu0 %v259
  %v535 = vpop.f32.mrb[0].mxu0
  %v536 = vadd.f32 0.0, %v535
  %v537 = vpop.f32.mrb[0].mxu0
  %v538 = vpop.f32.mrb[0].mxu0
  %v539 = vadd.f32 0.0, %v538
  %v540 = vpop.f32.mrb[0].mxu0
  %541 = vmatprep.mubr.bf16.mxu0 %v401
  %542 = vmatmul.mubr.bf16.gmra.mrb[0].mxu0 %v261
  %v543 = vpop.f32.mrb[0].mxu0
  %v544 = vadd.f32 0.0, %v543
  %v545 = vpop.f32.mrb[0].mxu0
  %v546 = vpop.f32.mrb[0].mxu0
  %v547 = vadd.f32 0.0, %v546
  %v548 = vpop.f32.mrb[0].mxu0
  %549 = vmatprep.mubr.bf16.mxu0 %v404
  %550 = vmatmul.mubr.bf16.gmra.mrb[0].mxu0 %v263
  %v551 = vpop.f32.mrb[0].mxu0
  %v552 = vadd.f32 0.0, %v551
  %v553 = vpop.f32.mrb[0].mxu0
  %v554 = vpop.f32.mrb[0].mxu0
  %v555 = vadd.f32 0.0, %v554
  %v556 = vpop.f32.mrb[0].mxu0
  %557 = vmatprep.mubr.bf16.mxu0 %v407
  %558 = vmatmul.mubr.bf16.gmra.mrb[0].mxu0 %v265
  %v559 = vpop.f32.mrb[0].mxu0
  %v560 = vadd.f32 0.0, %v559
  %v561 = vpop.f32.mrb[0].mxu0
  %v562 = vpop.f32.mrb[0].mxu0
  %v563 = vadd.f32 0.0, %v562
  %v564 = vpop.f32.mrb[0].mxu0
  %565 = vmatprep.mubr.bf16.mxu0 %v410
  %566 = vmatmul.mubr.bf16.gmra.mrb[0].mxu0 %v267
  %v567 = vpop.f32.mrb[0].mxu0
  %v568 = vadd.f32 0.0, %v567
  %v569 = vpop.f32.mrb[0].mxu0
  %v570 = vpop.f32.mrb[0].mxu0
  %v571 = vadd.f32 0.0, %v570
  %v572 = vpop.f32.mrb[0].mxu0
  %573 = vmatprep.mubr.bf16.mxu0 %v413
  %574 = vmatmul.mubr.bf16.gmra.mrb[0].mxu0 %v269
  %v575 = vpop.f32.mrb[0].mxu0
  %v576 = vadd.f32 0.0, %v575
  %v577 = vpop.f32.mrb[0].mxu0
  %v578 = vpop.f32.mrb[0].mxu0
  %v579 = vadd.f32 0.0, %v578
  %v580 = vpop.f32.mrb[0].mxu0
  %581 = vmatprep.mubr.bf16.mxu0 %v416
  %582 = vmatmul.mubr.bf16.gmra.mrb[0].mxu0 %v271
  %v583 = vpop.f32.mrb[0].mxu0
  %v584 = vadd.f32 0.0, %v583
  %v585 = vpop.f32.mrb[0].mxu0
  %v586 = vpop.f32.mrb[0].mxu0
  %v587 = vadd.f32 0.0, %v586
  %v588 = vpop.f32.mrb[0].mxu0
  %589 = vmatprep.mubr.bf16.mxu0 %v419
  %590 = vmatmul.mubr.bf16.gmra.mrb[0].mxu0 %v273
  %v591 = vpop.f32.mrb[0].mxu0
  %v592 = vadd.f32 0.0, %v591
  %v593 = vpop.f32.mrb[0].mxu0
  %v594 = vpop.f32.mrb[0].mxu0
  %v595 = vadd.f32 0.0, %v594
  %v596 = vpop.f32.mrb[0].mxu0
  %597 = vmatprep.mubr.bf16.mxu0 %v422
  %598 = vmatmul.mubr.bf16.gmra.mrb[0].mxu0 %v275
  %v599 = vpop.f32.mrb[0].mxu0
  %v600 = vadd.f32 0.0, %v599
  %v601 = vpop.f32.mrb[0].mxu0
  %v602 = vpop.f32.mrb[0].mxu0
  %v603 = vadd.f32 0.0, %v602
  %v604 = vpop.f32.mrb[0].mxu0
  %605 = vmatprep.mubr.bf16.mxu0 %v425
  %606 = vmatmul.mubr.bf16.gmra.mrb[0].mxu0 %v277
  %v607 = vpop.f32.mrb[0].mxu0
  %v608 = vadd.f32 0.0, %v607
  %v609 = vpop.f32.mrb[0].mxu0
  %v610 = vpop.f32.mrb[0].mxu0
  %v611 = vadd.f32 0.0, %v610
  %v612 = vpop.f32.mrb[0].mxu0
  %613 = vmatprep.mubr.bf16.mxu0 %v428
  %614 = vmatmul.mubr.bf16.gmra.mrb[0].mxu0 %v279
  %v615 = vpop.f32.mrb[0].mxu0
  %v616 = vadd.f32 0.0, %v615
  %v617 = vpop.f32.mrb[0].mxu0
  %v618 = vpop.f32.mrb[0].mxu0
  %v619 = vadd.f32 0.0, %v618
  %v620 = vpop.f32.mrb[0].mxu0
  %621 = vmatprep.mubr.bf16.mxu0 %v431
  %622 = vmatmul.mubr.bf16.gmra.mrb[0].mxu0 %v281
  %v623 = vpop.f32.mrb[0].mxu0
  %v624 = vadd.f32 0.0, %v623
  %v625 = vpop.f32.mrb[0].mxu0
  %v626 = vpop.f32.mrb[0].mxu0
  %v627 = vadd.f32 0.0, %v626
  %v628 = vpop.f32.mrb[0].mxu0
  %629 = vmatprep.mubr.bf16.mxu0 %v434
  %630 = vmatmul.mubr.bf16.gmra.mrb[0].mxu0 %v283
  %v631 = vpop.f32.mrb[0].mxu0
  %v632 = vadd.f32 0.0, %v631
  %v633 = vpop.f32.mrb[0].mxu0
  %v634 = vpop.f32.mrb[0].mxu0
  %v635 = vadd.f32 0.0, %v634
  %v636 = vpop.f32.mrb[0].mxu0
  %637 = vmatprep.mubr.bf16.mxu0 %v437
  %638 = vmatmul.mubr.bf16.gmra.mrb[0].mxu0 %v285
  %v639 = vpop.f32.mrb[0].mxu0
  %v640 = vadd.f32 0.0, %v639
  %v641 = vpop.f32.mrb[0].mxu0
  %v642 = vpop.f32.mrb[0].mxu0
  %v643 = vadd.f32 0.0, %v642
  %v644 = vpop.f32.mrb[0].mxu0
  %645 = vmatprep.mubr.bf16.mxu0 %v440
  %646 = vmatmul.mubr.bf16.gmra.mrb[0].mxu0 %v287
  %v647 = vpop.f32.mrb[0].mxu0
  %v648 = vadd.f32 0.0, %v647
  %v649 = vpop.f32.mrb[0].mxu0
  %v650 = vpop.f32.mrb[0].mxu0
  %v651 = vadd.f32 0.0, %v650
  %v652 = vpop.f32.mrb[0].mxu0
  %653 = vmatprep.mubr.bf16.mxu0 %v443
  %654 = vmatmul.mubr.bf16.gmra.mrb[0].mxu0 %v289
  %v655 = vpop.f32.mrb[0].mxu0
  %v656 = vadd.f32 0.0, %v655
  %v657 = vpop.f32.mrb[0].mxu0
  %v658 = vpop.f32.mrb[0].mxu0
  %v659 = vadd.f32 0.0, %v658
  %v660 = vpop.f32.mrb[0].mxu0
  %661 = vmatprep.mubr.bf16.mxu0 %v446
  %662 = vmatmul.mubr.bf16.gmra.mrb[0].mxu0 %v291
  %v663 = vpop.f32.mrb[0].mxu0
  %v664 = vadd.f32 0.0, %v663
  %v665 = vpop.f32.mrb[0].mxu0
  %v666 = vpop.f32.mrb[0].mxu0
  %v667 = vadd.f32 0.0, %v666
  %v668 = vpop.f32.mrb[0].mxu0
  %669 = vmatprep.mubr.bf16.mxu0 %v449
  %670 = vmatmul.mubr.bf16.gmra.mrb[0].mxu0 %v293
  %v671 = vpop.f32.mrb[0].mxu0
  %v672 = vadd.f32 0.0, %v671
  %v673 = vpop.f32.mrb[0].mxu0
  %v674 = vpop.f32.mrb[0].mxu0
  %v675 = vadd.f32 0.0, %v674
  %v676 = vpop.f32.mrb[0].mxu0
  %677 = vmatprep.mubr.bf16.mxu0 %v452
  %678 = vmatmul.mubr.bf16.gmra.mrb[0].mxu0 %v295
  %v679 = vpop.f32.mrb[0].mxu0
  %v680 = vadd.f32 0.0, %v679
  %v681 = vpop.f32.mrb[0].mxu0
  %v682 = vpop.f32.mrb[0].mxu0
  %v683 = vadd.f32 0.0, %v682
  %v684 = vpop.f32.mrb[0].mxu0
  %685 = vmatprep.mubr.bf16.mxu0 %v455
  %686 = vmatmul.mubr.bf16.gmra.mrb[0].mxu0 %v297
  %v687 = vpop.f32.mrb[0].mxu0
  %v688 = vadd.f32 0.0, %v687
  %v689 = vpop.f32.mrb[0].mxu0
  %v690 = vpop.f32.mrb[0].mxu0
  %v691 = vadd.f32 0.0, %v690
  %v692 = vpop.f32.mrb[0].mxu0
  %693 = vdwg.mxu0
  %v694 = vmax.f32 %v496, 0.0
  %v695 = vmax.f32 %v499, 0.0
  %v696 = vmax.f32 %v504, 0.0
  %v697 = vmax.f32 %v507, 0.0
  %v698 = vmax.f32 %v512, 0.0
  %v699 = vmax.f32 %v515, 0.0
  %v700 = vmax.f32 %v520, 0.0
  %v701 = vmax.f32 %v523, 0.0
  %v702 = vmax.f32 %v528, 0.0
  %v703 = vmax.f32 %v531, 0.0
  %v704 = vmax.f32 %v536, 0.0
  %v705 = vmax.f32 %v539, 0.0
  %v706 = vmax.f32 %v544, 0.0
  %v707 = vmax.f32 %v547, 0.0
  %v708 = vmax.f32 %v552, 0.0
  %v709 = vmax.f32 %v555, 0.0
  %v710 = vmax.f32 %v560, 0.0
  %v711 = vmax.f32 %v563, 0.0
  %v712 = vmax.f32 %v568, 0.0
  %v713 = vmax.f32 %v571, 0.0
  %v714 = vmax.f32 %v576, 0.0
  %v715 = vmax.f32 %v579, 0.0
  %v716 = vmax.f32 %v584, 0.0
  %v717 = vmax.f32 %v587, 0.0
  %v718 = vmax.f32 %v592, 0.0
  %v719 = vmax.f32 %v595, 0.0
  %v720 = vmax.f32 %v600, 0.0
  %v721 = vmax.f32 %v603, 0.0
  %v722 = vmax.f32 %v608, 0.0
  %v723 = vmax.f32 %v611, 0.0
  %v724 = vmax.f32 %v616, 0.0
  %v725 = vmax.f32 %v619, 0.0
  %v726 = vmax.f32 %v624, 0.0
  %v727 = vmax.f32 %v627, 0.0
  %v728 = vmax.f32 %v632, 0.0
  %v729 = vmax.f32 %v635, 0.0
  %v730 = vmax.f32 %v640, 0.0
  %v731 = vmax.f32 %v643, 0.0
  %v732 = vmax.f32 %v648, 0.0
  %v733 = vmax.f32 %v651, 0.0
  %v734 = vmax.f32 %v656, 0.0
  %v735 = vmax.f32 %v659, 0.0
  %v736 = vmax.f32 %v664, 0.0
  %v737 = vmax.f32 %v667, 0.0
  %v738 = vmax.f32 %v672, 0.0
  %v739 = vmax.f32 %v675, 0.0
  %v740 = vmax.f32 %v680, 0.0
  %v741 = vmax.f32 %v683, 0.0
  %v742 = vmax.f32 %v688, 0.0
  %v743 = vmax.f32 %v691, 0.0
  %v744 = vpack.c.bf16 %v695, %v694
  %v745 = vpack.c.bf16 %v697, %v696
  %v746 = vpack.c.bf16 %v699, %v698
  %v747 = vpack.c.bf16 %v701, %v700
  %v748 = vpack.c.bf16 %v703, %v702
  %v749 = vpack.c.bf16 %v705, %v704
  %v750 = vpack.c.bf16 %v707, %v706
  %v751 = vpack.c.bf16 %v709, %v708
  %v752 = vpack.c.bf16 %v711, %v710
  %v753 = vpack.c.bf16 %v713, %v712
  %v754 = vpack.c.bf16 %v715, %v714
  %v755 = vpack.c.bf16 %v717, %v716
  %v756 = vpack.c.bf16 %v719, %v718
  %v757 = vpack.c.bf16 %v721, %v720
  %v758 = vpack.c.bf16 %v723, %v722
  %v759 = vpack.c.bf16 %v725, %v724
  %v760 = vpack.c.bf16 %v727, %v726
  %v761 = vpack.c.bf16 %v729, %v728
  %v762 = vpack.c.bf16 %v731, %v730
  %v763 = vpack.c.bf16 %v733, %v732
  %v764 = vpack.c.bf16 %v735, %v734
  %v765 = vpack.c.bf16 %v737, %v736
  %v766 = vpack.c.bf16 %v739, %v738
  %v767 = vpack.c.bf16 %v741, %v740
  %v768 = vpack.c.bf16 %v743, %v742
  %vm769 = vcmask 523264
  %770 = vst.msk [vmem:[#allocation2] sm:$0xff] %vm769, %v744
  %771 = vst.msk [vmem:[#allocation2 + $0x8] sm:$0xff] %vm769, %v745
  %772 = vst.msk [vmem:[#allocation2 + $0x10] sm:$0xff] %vm769, %v746
  %773 = vst.msk [vmem:[#allocation2 + $0x18] sm:$0xff] %vm769, %v747
  %774 = vst.msk [vmem:[#allocation2 + $0x20] sm:$0xff] %vm769, %v748
  %775 = vst.msk [vmem:[#allocation2 + $0x28] sm:$0xff] %vm769, %v749
  %776 = vst.msk [vmem:[#allocation2 + $0x30] sm:$0xff] %vm769, %v750
  %777 = vst.msk [vmem:[#allocation2 + $0x38] sm:$0xff] %vm769, %v751
  %778 = vst.msk [vmem:[#allocation2 + $0x40] sm:$0xff] %vm769, %v752
  %779 = vst.msk [vmem:[#allocation2 + $0x48] sm:$0xff] %vm769, %v753
  %780 = vst.msk [vmem:[#allocation2 + $0x50] sm:$0xff] %vm769, %v754
  %781 = vst.msk [vmem:[#allocation2 + $0x58] sm:$0xff] %vm769, %v755
  %782 = vst.msk [vmem:[#allocation2 + $0x60] sm:$0xff] %vm769, %v756
  %783 = vst.msk [vmem:[#allocation2 + $0x68] sm:$0xff] %vm769, %v757
  %784 = vst.msk [vmem:[#allocation2 + $0x70] sm:$0xff] %vm769, %v758
  %785 = vst.msk [vmem:[#allocation2 + $0x78] sm:$0xff] %vm769, %v759
  %786 = vst.msk [vmem:[#allocation2 + $0x80] sm:$0xff] %vm769, %v760
  %787 = vst.msk [vmem:[#allocation2 + $0x88] sm:$0xff] %vm769, %v761
  %788 = vst.msk [vmem:[#allocation2 + $0x90] sm:$0xff] %vm769, %v762
  %789 = vst.msk [vmem:[#allocation2 + $0x98] sm:$0xff] %vm769, %v763
  %790 = vst.msk [vmem:[#allocation2 + $0xa0] sm:$0xff] %vm769, %v764
  %791 = vst.msk [vmem:[#allocation2 + $0xa8] sm:$0xff] %vm769, %v765
  %792 = vst.msk [vmem:[#allocation2 + $0xb0] sm:$0xff] %vm769, %v766
  %793 = vst.msk [vmem:[#allocation2 + $0xb8] sm:$0xff] %vm769, %v767
  %794 = vst.msk [vmem:[#allocation2 + $0xc0] sm:$0xff] %vm769, %v768
  %v795 = vld [vmem:[#allocation2] sm:$0xff]
  %v796 = vld [vmem:[#allocation2 + $0x8] sm:$0xff]
  %v797 = vld [vmem:[#allocation2 + $0x10] sm:$0xff]
  %v798 = vld [vmem:[#allocation2 + $0x18] sm:$0xff]
  %799 = vst.msk [vmem:[#allocation3] sm:$0xff] %vm769, %v795
  %800 = vst.msk [vmem:[#allocation3 + $0x10] sm:$0xff] %vm769, %v796
  %801 = vst.msk [vmem:[#allocation3 + $0x20] sm:$0xff] %vm769, %v797
  %802 = vst.msk [vmem:[#allocation3 + $0x30] sm:$0xff] %vm769, %v798
  %v803 = vld [vmem:[#allocation2 + $0x8] sm:$0xff]
  %v804 = vld [vmem:[#allocation2 + $0x10] sm:$0xff]
  %v805 = vld [vmem:[#allocation2 + $0x18] sm:$0xff]
  %v806 = vld [vmem:[#allocation2 + $0x20] sm:$0xff]
  %811 = vrot.lane.b32.xlu0 %v803, 64
  %v812 = vpop.permute.xlu0 %811
  %813 = vrot.lane.b32.xlu0 %v804, 64
  %v814 = vpop.permute.xlu0 %813
  %815 = vrot.lane.b32.xlu0 %v805, 64
  %v816 = vpop.permute.xlu0 %815
  %817 = vrot.lane.b32.xlu0 %v806, 64
  %v818 = vpop.permute.xlu0 %817
  %vm823 = vcmask 1048064
  %824 = vst.msk [vmem:[#allocation3] sm:$0xff] %vm823, %v812
  %825 = vst.msk [vmem:[#allocation3 + $0x10] sm:$0xff] %vm823, %v814
  %826 = vst.msk [vmem:[#allocation3 + $0x20] sm:$0xff] %vm823, %v816
  %827 = vst.msk [vmem:[#allocation3 + $0x30] sm:$0xff] %vm823, %v818
  %v828 = vld [vmem:[#allocation2 + $0x28] sm:$0xff]
  %v829 = vld [vmem:[#allocation2 + $0x30] sm:$0xff]
  %v830 = vld [vmem:[#allocation2 + $0x38] sm:$0xff]
  %v831 = vld [vmem:[#allocation2 + $0x40] sm:$0xff]
  %832 = vst.msk [vmem:[#allocation3 + $0x8] sm:$0xff] %vm769, %v828
  %833 = vst.msk [vmem:[#allocation3 + $0x18] sm:$0xff] %vm769, %v829
  %834 = vst.msk [vmem:[#allocation3 + $0x28] sm:$0xff] %vm769, %v830
  %835 = vst.msk [vmem:[#allocation3 + $0x38] sm:$0xff] %vm769, %v831
  %v836 = vld [vmem:[#allocation2 + $0x30] sm:$0xff]
  %v837 = vld [vmem:[#allocation2 + $0x38] sm:$0xff]
  %v838 = vld [vmem:[#allocation2 + $0x40] sm:$0xff]
  %v839 = vld [vmem:[#allocation2 + $0x48] sm:$0xff]
  %844 = vrot.lane.b32.xlu0 %v836, 64
  %v845 = vpop.permute.xlu0 %844
  %846 = vrot.lane.b32.xlu0 %v837, 64
  %v847 = vpop.permute.xlu0 %846
  %848 = vrot.lane.b32.xlu0 %v838, 64
  %v849 = vpop.permute.xlu0 %848
  %850 = vrot.lane.b32.xlu0 %v839, 64
  %v851 = vpop.permute.xlu0 %850
  %856 = vst.msk [vmem:[#allocation3 + $0x8] sm:$0xff] %vm823, %v845
  %857 = vst.msk [vmem:[#allocation3 + $0x18] sm:$0xff] %vm823, %v847
  %858 = vst.msk [vmem:[#allocation3 + $0x28] sm:$0xff] %vm823, %v849
  %859 = vst.msk [vmem:[#allocation3 + $0x38] sm:$0xff] %vm823, %v851
  %v860 = vld [vmem:[#allocation2 + $0x28] sm:$0xff]
  %v861 = vld [vmem:[#allocation2 + $0x30] sm:$0xff]
  %v862 = vld [vmem:[#allocation2 + $0x38] sm:$0xff]
  %v863 = vld [vmem:[#allocation2 + $0x40] sm:$0xff]
  %864 = vst.msk [vmem:[#allocation3 + $0x40] sm:$0xff] %vm769, %v860
  %865 = vst.msk [vmem:[#allocation3 + $0x50] sm:$0xff] %vm769, %v861
  %866 = vst.msk [vmem:[#allocation3 + $0x60] sm:$0xff] %vm769, %v862
  %867 = vst.msk [vmem:[#allocation3 + $0x70] sm:$0xff] %vm769, %v863
  %v868 = vld [vmem:[#allocation2 + $0x30] sm:$0xff]
  %v869 = vld [vmem:[#allocation2 + $0x38] sm:$0xff]
  %v870 = vld [vmem:[#allocation2 + $0x40] sm:$0xff]
  %v871 = vld [vmem:[#allocation2 + $0x48] sm:$0xff]
  %876 = vrot.lane.b32.xlu0 %v868, 64
  %v877 = vpop.permute.xlu0 %876
  %878 = vrot.lane.b32.xlu0 %v869, 64
  %v879 = vpop.permute.xlu0 %878
  %880 = vrot.lane.b32.xlu0 %v870, 64
  %v881 = vpop.permute.xlu0 %880
  %882 = vrot.lane.b32.xlu0 %v871, 64
  %v883 = vpop.permute.xlu0 %882
  %888 = vst.msk [vmem:[#allocation3 + $0x40] sm:$0xff] %vm823, %v877
  %889 = vst.msk [vmem:[#allocation3 + $0x50] sm:$0xff] %vm823, %v879
  %890 = vst.msk [vmem:[#allocation3 + $0x60] sm:$0xff] %vm823, %v881
  %891 = vst.msk [vmem:[#allocation3 + $0x70] sm:$0xff] %vm823, %v883
  %v892 = vld [vmem:[#allocation2 + $0x50] sm:$0xff]
  %v893 = vld [vmem:[#allocation2 + $0x58] sm:$0xff]
  %v894 = vld [vmem:[#allocation2 + $0x60] sm:$0xff]
  %v895 = vld [vmem:[#allocation2 + $0x68] sm:$0xff]
  %896 = vst.msk [vmem:[#allocation3 + $0x48] sm:$0xff] %vm769, %v892
  %897 = vst.msk [vmem:[#allocation3 + $0x58] sm:$0xff] %vm769, %v893
  %898 = vst.msk [vmem:[#allocation3 + $0x68] sm:$0xff] %vm769, %v894
  %899 = vst.msk [vmem:[#allocation3 + $0x78] sm:$0xff] %vm769, %v895
  %v900 = vld [vmem:[#allocation2 + $0x58] sm:$0xff]
  %v901 = vld [vmem:[#allocation2 + $0x60] sm:$0xff]
  %v902 = vld [vmem:[#allocation2 + $0x68] sm:$0xff]
  %v903 = vld [vmem:[#allocation2 + $0x70] sm:$0xff]
  %908 = vrot.lane.b32.xlu0 %v900, 64
  %v909 = vpop.permute.xlu0 %908
  %910 = vrot.lane.b32.xlu0 %v901, 64
  %v911 = vpop.permute.xlu0 %910
  %912 = vrot.lane.b32.xlu0 %v902, 64
  %v913 = vpop.permute.xlu0 %912
  %914 = vrot.lane.b32.xlu0 %v903, 64
  %v915 = vpop.permute.xlu0 %914
  %920 = vst.msk [vmem:[#allocation3 + $0x48] sm:$0xff] %vm823, %v909
  %921 = vst.msk [vmem:[#allocation3 + $0x58] sm:$0xff] %vm823, %v911
  %922 = vst.msk [vmem:[#allocation3 + $0x68] sm:$0xff] %vm823, %v913
  %923 = vst.msk [vmem:[#allocation3 + $0x78] sm:$0xff] %vm823, %v915
  %v924 = vld [vmem:[#allocation2 + $0x50] sm:$0xff]
  %v925 = vld [vmem:[#allocation2 + $0x58] sm:$0xff]
  %v926 = vld [vmem:[#allocation2 + $0x60] sm:$0xff]
  %v927 = vld [vmem:[#allocation2 + $0x68] sm:$0xff]
  %928 = vst.msk [vmem:[#allocation3 + $0x80] sm:$0xff] %vm769, %v924
  %929 = vst.msk [vmem:[#allocation3 + $0x90] sm:$0xff] %vm769, %v925
  %930 = vst.msk [vmem:[#allocation3 + $0xa0] sm:$0xff] %vm769, %v926
  %931 = vst.msk [vmem:[#allocation3 + $0xb0] sm:$0xff] %vm769, %v927
  %v932 = vld [vmem:[#allocation2 + $0x58] sm:$0xff]
  %v933 = vld [vmem:[#allocation2 + $0x60] sm:$0xff]
  %v934 = vld [vmem:[#allocation2 + $0x68] sm:$0xff]
  %v935 = vld [vmem:[#allocation2 + $0x70] sm:$0xff]
  %940 = vrot.lane.b32.xlu0 %v932, 64
  %v941 = vpop.permute.xlu0 %940
  %942 = vrot.lane.b32.xlu0 %v933, 64
  %v943 = vpop.permute.xlu0 %942
  %944 = vrot.lane.b32.xlu0 %v934, 64
  %v945 = vpop.permute.xlu0 %944
  %946 = vrot.lane.b32.xlu0 %v935, 64
  %v947 = vpop.permute.xlu0 %946
  %952 = vst.msk [vmem:[#allocation3 + $0x80] sm:$0xff] %vm823, %v941
  %953 = vst.msk [vmem:[#allocation3 + $0x90] sm:$0xff] %vm823, %v943
  %954 = vst.msk [vmem:[#allocation3 + $0xa0] sm:$0xff] %vm823, %v945
  %955 = vst.msk [vmem:[#allocation3 + $0xb0] sm:$0xff] %vm823, %v947
  %v956 = vld [vmem:[#allocation2 + $0x78] sm:$0xff]
  %v957 = vld [vmem:[#allocation2 + $0x80] sm:$0xff]
  %v958 = vld [vmem:[#allocation2 + $0x88] sm:$0xff]
  %v959 = vld [vmem:[#allocation2 + $0x90] sm:$0xff]
  %960 = vst.msk [vmem:[#allocation3 + $0x88] sm:$0xff] %vm769, %v956
  %961 = vst.msk [vmem:[#allocation3 + $0x98] sm:$0xff] %vm769, %v957
  %962 = vst.msk [vmem:[#allocation3 + $0xa8] sm:$0xff] %vm769, %v958
  %963 = vst.msk [vmem:[#allocation3 + $0xb8] sm:$0xff] %vm769, %v959
  %v964 = vld [vmem:[#allocation2 + $0x80] sm:$0xff]
  %v965 = vld [vmem:[#allocation2 + $0x88] sm:$0xff]
  %v966 = vld [vmem:[#allocation2 + $0x90] sm:$0xff]
  %v967 = vld [vmem:[#allocation2 + $0x98] sm:$0xff]
  %972 = vrot.lane.b32.xlu0 %v964, 64
  %v973 = vpop.permute.xlu0 %972
  %974 = vrot.lane.b32.xlu0 %v965, 64
  %v975 = vpop.permute.xlu0 %974
  %976 = vrot.lane.b32.xlu0 %v966, 64
  %v977 = vpop.permute.xlu0 %976
  %978 = vrot.lane.b32.xlu0 %v967, 64
  %v979 = vpop.permute.xlu0 %978
  %984 = vst.msk [vmem:[#allocation3 + $0x88] sm:$0xff] %vm823, %v973
  %985 = vst.msk [vmem:[#allocation3 + $0x98] sm:$0xff] %vm823, %v975
  %986 = vst.msk [vmem:[#allocation3 + $0xa8] sm:$0xff] %vm823, %v977
  %987 = vst.msk [vmem:[#allocation3 + $0xb8] sm:$0xff] %vm823, %v979
  %v988 = vld [vmem:[#allocation2 + $0x78] sm:$0xff]
  %v989 = vld [vmem:[#allocation2 + $0x80] sm:$0xff]
  %v990 = vld [vmem:[#allocation2 + $0x88] sm:$0xff]
  %v991 = vld [vmem:[#allocation2 + $0x90] sm:$0xff]
  %992 = vst.msk [vmem:[#allocation3 + $0xc0] sm:$0xff] %vm769, %v988
  %993 = vst.msk [vmem:[#allocation3 + $0xd0] sm:$0xff] %vm769, %v989
  %994 = vst.msk [vmem:[#allocation3 + $0xe0] sm:$0xff] %vm769, %v990
  %995 = vst.msk [vmem:[#allocation3 + $0xf0] sm:$0xff] %vm769, %v991
  %v996 = vld [vmem:[#allocation2 + $0x80] sm:$0xff]
  %v997 = vld [vmem:[#allocation2 + $0x88] sm:$0xff]
  %v998 = vld [vmem:[#allocation2 + $0x90] sm:$0xff]
  %v999 = vld [vmem:[#allocation2 + $0x98] sm:$0xff]
  %1004 = vrot.lane.b32.xlu0 %v996, 64
  %v1005 = vpop.permute.xlu0 %1004
  %1006 = vrot.lane.b32.xlu0 %v997, 64
  %v1007 = vpop.permute.xlu0 %1006
  %1008 = vrot.lane.b32.xlu0 %v998, 64
  %v1009 = vpop.permute.xlu0 %1008
  %1010 = vrot.lane.b32.xlu0 %v999, 64
  %v1011 = vpop.permute.xlu0 %1010
  %1016 = vst.msk [vmem:[#allocation3 + $0xc0] sm:$0xff] %vm823, %v1005
  %1017 = vst.msk [vmem:[#allocation3 + $0xd0] sm:$0xff] %vm823, %v1007
  %1018 = vst.msk [vmem:[#allocation3 + $0xe0] sm:$0xff] %vm823, %v1009
  %1019 = vst.msk [vmem:[#allocation3 + $0xf0] sm:$0xff] %vm823, %v1011
  %v1020 = vld [vmem:[#allocation2 + $0xa0] sm:$0xff]
  %v1021 = vld [vmem:[#allocation2 + $0xa8] sm:$0xff]
  %v1022 = vld [vmem:[#allocation2 + $0xb0] sm:$0xff]
  %v1023 = vld [vmem:[#allocation2 + $0xb8] sm:$0xff]
  %1024 = vst.msk [vmem:[#allocation3 + $0xc8] sm:$0xff] %vm769, %v1020
  %1025 = vst.msk [vmem:[#allocation3 + $0xd8] sm:$0xff] %vm769, %v1021
  %1026 = vst.msk [vmem:[#allocation3 + $0xe8] sm:$0xff] %vm769, %v1022
  %1027 = vst.msk [vmem:[#allocation3 + $0xf8] sm:$0xff] %vm769, %v1023
  %v1028 = vld [vmem:[#allocation2 + $0xa8] sm:$0xff]
  %v1029 = vld [vmem:[#allocation2 + $0xb0] sm:$0xff]
  %v1030 = vld [vmem:[#allocation2 + $0xb8] sm:$0xff]
  %v1031 = vld [vmem:[#allocation2 + $0xc0] sm:$0xff]
  %1036 = vrot.lane.b32.xlu0 %v1028, 64
  %v1037 = vpop.permute.xlu0 %1036
  %1038 = vrot.lane.b32.xlu0 %v1029, 64
  %v1039 = vpop.permute.xlu0 %1038
  %1040 = vrot.lane.b32.xlu0 %v1030, 64
  %v1041 = vpop.permute.xlu0 %1040
  %1042 = vrot.lane.b32.xlu0 %v1031, 64
  %v1043 = vpop.permute.xlu0 %1042
  %1048 = vst.msk [vmem:[#allocation3 + $0xc8] sm:$0xff] %vm823, %v1037
  %1049 = vst.msk [vmem:[#allocation3 + $0xd8] sm:$0xff] %vm823, %v1039
  %1050 = vst.msk [vmem:[#allocation3 + $0xe8] sm:$0xff] %vm823, %v1041
  %1051 = vst.msk [vmem:[#allocation3 + $0xf8] sm:$0xff] %vm823, %v1043
  %v1052 = vld [vmem:[#allocation3] sm:$0xff]
  %v1053 = vld [vmem:[#allocation3 + $0x8] sm:$0xff]
  %v1054 = vld [vmem:[#allocation3 + $0x10] sm:$0xff]
  %v1055 = vld [vmem:[#allocation3 + $0x18] sm:$0xff]
  %v1056 = vld [vmem:[#allocation3 + $0x20] sm:$0xff]
  %v1057 = vld [vmem:[#allocation3 + $0x28] sm:$0xff]
  %v1058 = vld [vmem:[#allocation3 + $0x30] sm:$0xff]
  %v1059 = vld [vmem:[#allocation3 + $0x38] sm:$0xff]
  %v1060 = vld [vmem:[#allocation3 + $0x40] sm:$0xff]
  %v1061 = vld [vmem:[#allocation3 + $0x48] sm:$0xff]
  %v1062 = vld [vmem:[#allocation3 + $0x50] sm:$0xff]
  %v1063 = vld [vmem:[#allocation3 + $0x58] sm:$0xff]
  %v1064 = vld [vmem:[#allocation3 + $0x60] sm:$0xff]
  %v1065 = vld [vmem:[#allocation3 + $0x68] sm:$0xff]
  %v1066 = vld [vmem:[#allocation3 + $0x70] sm:$0xff]
  %v1067 = vld [vmem:[#allocation3 + $0x78] sm:$0xff]
  %v1068 = vld [vmem:[#allocation3 + $0x80] sm:$0xff]
  %v1069 = vld [vmem:[#allocation3 + $0x88] sm:$0xff]
  %v1070 = vld [vmem:[#allocation3 + $0x90] sm:$0xff]
  %v1071 = vld [vmem:[#allocation3 + $0x98] sm:$0xff]
  %v1072 = vld [vmem:[#allocation3 + $0xa0] sm:$0xff]
  %v1073 = vld [vmem:[#allocation3 + $0xa8] sm:$0xff]
  %v1074 = vld [vmem:[#allocation3 + $0xb0] sm:$0xff]
  %v1075 = vld [vmem:[#allocation3 + $0xb8] sm:$0xff]
  %v1076 = vld [vmem:[#allocation3 + $0xc0] sm:$0xff]
  %v1077 = vld [vmem:[#allocation3 + $0xc8] sm:$0xff]
  %v1078 = vld [vmem:[#allocation3 + $0xd0] sm:$0xff]
  %v1079 = vld [vmem:[#allocation3 + $0xd8] sm:$0xff]
  %v1080 = vld [vmem:[#allocation3 + $0xe0] sm:$0xff]
  %v1081 = vld [vmem:[#allocation3 + $0xe8] sm:$0xff]
  %v1082 = vld [vmem:[#allocation3 + $0xf0] sm:$0xff]
  %v1083 = vld [vmem:[#allocation3 + $0xf8] sm:$0xff]
  %v1084 = vld [vmem:[%s2] sm:$0xf]
  %v1085 = vld [vmem:[%s2 + $0x4] sm:$0xf]
  %v1086 = vld [vmem:[%s2 + $0x8] sm:$0xf]
  %v1087 = vld [vmem:[%s2 + $0xc] sm:$0xf]
  %v1088 = vld [vmem:[%s2 + $0x10] sm:$0xf]
  %v1089 = vld [vmem:[%s2 + $0x14] sm:$0xf]
  %v1090 = vld [vmem:[%s2 + $0x18] sm:$0xf]
  %v1091 = vld [vmem:[%s2 + $0x1c] sm:$0xf]
  %v1092 = vld [vmem:[%s2 + $0x20] sm:$0xf]
  %v1093 = vld [vmem:[%s2 + $0x24] sm:$0xf]
  %v1094 = vld [vmem:[%s2 + $0x28] sm:$0xf]
  %v1095 = vld [vmem:[%s2 + $0x2c] sm:$0xf]
  %v1096 = vld [vmem:[%s2 + $0x30] sm:$0xf]
  %v1097 = vld [vmem:[%s2 + $0x34] sm:$0xf]
  %v1098 = vld [vmem:[%s2 + $0x38] sm:$0xf]
  %v1099 = vld [vmem:[%s2 + $0x3c] sm:$0xf]
  %v1100 = vld [vmem:[%s2 + $0x40] sm:$0xf]
  %v1101 = vld [vmem:[%s2 + $0x44] sm:$0xf]
  %v1102 = vld [vmem:[%s2 + $0x48] sm:$0xf]
  %v1103 = vld [vmem:[%s2 + $0x4c] sm:$0xf]
  %v1104 = vld [vmem:[%s2 + $0x50] sm:$0xf]
  %v1105 = vld [vmem:[%s2 + $0x54] sm:$0xf]
  %v1106 = vld [vmem:[%s2 + $0x58] sm:$0xf]
  %v1107 = vld [vmem:[%s2 + $0x5c] sm:$0xf]
  %v1108 = vld [vmem:[%s2 + $0x60] sm:$0xf]
  %v1109 = vld [vmem:[%s2 + $0x64] sm:$0xf]
  %v1110 = vld [vmem:[%s2 + $0x68] sm:$0xf]
  %v1111 = vld [vmem:[%s2 + $0x6c] sm:$0xf]
  %v1112 = vld [vmem:[%s2 + $0x70] sm:$0xf]
  %v1113 = vld [vmem:[%s2 + $0x74] sm:$0xf]
  %v1114 = vld [vmem:[%s2 + $0x78] sm:$0xf]
  %v1115 = vld [vmem:[%s2 + $0x7c] sm:$0xf]
  %v1116 = vld [vmem:[%s3] sm:$0x1]
  %v1118 = vlaneseq
  %v1119 = vshrl.u32 %v1118, 7
  %v1120 = vsub.s32 0, %v1119
  %v1121 = vrot.slane %v1116, %v1120
  %v1155 = vunpack.c.l.b16 %v1084
  %v1156 = vunpack.c.l.b16 %v1085
  %v1157 = vunpack.c.l.b16 %v1086
  %v1158 = vunpack.c.l.b16 %v1087
  %v1159 = vunpack.c.l.b16 %v1088
  %v1160 = vunpack.c.l.b16 %v1089
  %v1161 = vunpack.c.l.b16 %v1090
  %v1162 = vunpack.c.l.b16 %v1091
  %v1163 = vunpack.c.l.b16 %v1092
  %v1164 = vunpack.c.l.b16 %v1093
  %v1165 = vunpack.c.l.b16 %v1094
  %v1166 = vunpack.c.l.b16 %v1095
  %v1167 = vunpack.c.l.b16 %v1096
  %v1168 = vunpack.c.l.b16 %v1097
  %v1169 = vunpack.c.l.b16 %v1098
  %v1170 = vunpack.c.l.b16 %v1099
  %v1171 = vunpack.c.l.b16 %v1100
  %v1172 = vunpack.c.l.b16 %v1101
  %v1173 = vunpack.c.l.b16 %v1102
  %v1174 = vunpack.c.l.b16 %v1103
  %v1175 = vunpack.c.l.b16 %v1104
  %v1176 = vunpack.c.l.b16 %v1105
  %v1177 = vunpack.c.l.b16 %v1106
  %v1178 = vunpack.c.l.b16 %v1107
  %v1179 = vunpack.c.l.b16 %v1108
  %v1180 = vunpack.c.l.b16 %v1109
  %v1181 = vunpack.c.l.b16 %v1110
  %v1182 = vunpack.c.l.b16 %v1111
  %v1183 = vunpack.c.l.b16 %v1112
  %v1184 = vunpack.c.l.b16 %v1113
  %v1185 = vunpack.c.l.b16 %v1114
  %v1186 = vunpack.c.l.b16 %v1115
  %v1187 = vpack.c.b16 %v1156, %v1155
  %v1188 = vpack.c.b16 %v1158, %v1157
  %v1189 = vpack.c.b16 %v1160, %v1159
  %v1190 = vpack.c.b16 %v1162, %v1161
  %v1191 = vpack.c.b16 %v1164, %v1163
  %v1192 = vpack.c.b16 %v1166, %v1165
  %v1193 = vpack.c.b16 %v1168, %v1167
  %v1194 = vpack.c.b16 %v1170, %v1169
  %v1195 = vpack.c.b16 %v1172, %v1171
  %v1196 = vpack.c.b16 %v1174, %v1173
  %v1197 = vpack.c.b16 %v1176, %v1175
  %v1198 = vpack.c.b16 %v1178, %v1177
  %v1199 = vpack.c.b16 %v1180, %v1179
  %v1200 = vpack.c.b16 %v1182, %v1181
  %v1201 = vpack.c.b16 %v1184, %v1183
  %v1202 = vpack.c.b16 %v1186, %v1185
  %1219 = vmatprep.subr.bf16.mxu0 0
  %1220 = vmatpush1.bf16.msra.mxu0 %v1187
  %1221 = vmatprep.subr.bf16.mxu0 0
  %1222 = vmatpush1.bf16.msra.mxu0 %v1188
  %1223 = vmatprep.subr.bf16.mxu0 0
  %1224 = vmatpush1.bf16.msra.mxu0 %v1189
  %1225 = vmatprep.subr.bf16.mxu0 0
  %1226 = vmatpush1.bf16.msra.mxu0 %v1190
  %1227 = vmatprep.subr.bf16.mxu0 0
  %1228 = vmatpush1.bf16.msra.mxu0 %v1191
  %1229 = vmatprep.subr.bf16.mxu0 0
  %1230 = vmatpush1.bf16.msra.mxu0 %v1192
  %1231 = vmatprep.subr.bf16.mxu0 0
  %1232 = vmatpush1.bf16.msra.mxu0 %v1193
  %1233 = vmatprep.subr.bf16.mxu0 0
  %1234 = vmatpush1.bf16.msra.mxu0 %v1194
  %1235 = vmatprep.subr.bf16.mxu0 0
  %1236 = vmatpush1.bf16.msra.mxu0 %v1195
  %1237 = vmatprep.subr.bf16.mxu0 0
  %1238 = vmatpush1.bf16.msra.mxu0 %v1196
  %1239 = vmatprep.subr.bf16.mxu0 0
  %1240 = vmatpush1.bf16.msra.mxu0 %v1197
  %1241 = vmatprep.subr.bf16.mxu0 0
  %1242 = vmatpush1.bf16.msra.mxu0 %v1198
  %1243 = vmatprep.subr.bf16.mxu0 0
  %1244 = vmatpush1.bf16.msra.mxu0 %v1199
  %1245 = vmatprep.subr.bf16.mxu0 0
  %1246 = vmatpush1.bf16.msra.mxu0 %v1200
  %1247 = vmatprep.subr.bf16.mxu0 0
  %1248 = vmatpush1.bf16.msra.mxu0 %v1201
  %1249 = vmatprep.subr.bf16.mxu0 0
  %1250 = vmatpush1.bf16.msra.mxu0 %v1202
  %1251 = vmatprep.mubr.bf16.mxu0 %v1053
  %1252 = vmatmul.mubr.bf16.gmra.mrb[0].mxu0 %v1052
  %v1253 = vpop.f32.mrb[0].mxu0
  %v1254 = vadd.f32 %v1121, %v1253
  %v1255 = vpop.f32.mrb[0].mxu0
  %v1256 = vpop.f32.mrb[0].mxu0
  %v1257 = vadd.f32 %v1121, %v1256
  %v1258 = vpop.f32.mrb[0].mxu0
  %1259 = vmatprep.mubr.bf16.mxu0 %v1055
  %1260 = vmatmul.mubr.bf16.gmra.mrb[0].mxu0 %v1054
  %v1261 = vpop.f32.mrb[0].mxu0
  %v1262 = vadd.f32 %v1121, %v1261
  %v1263 = vpop.f32.mrb[0].mxu0
  %v1264 = vpop.f32.mrb[0].mxu0
  %v1265 = vadd.f32 %v1121, %v1264
  %v1266 = vpop.f32.mrb[0].mxu0
  %1267 = vmatprep.mubr.bf16.mxu0 %v1057
  %1268 = vmatmul.mubr.bf16.gmra.mrb[0].mxu0 %v1056
  %v1269 = vpop.f32.mrb[0].mxu0
  %v1270 = vadd.f32 %v1121, %v1269
  %v1271 = vpop.f32.mrb[0].mxu0
  %v1272 = vpop.f32.mrb[0].mxu0
  %v1273 = vadd.f32 %v1121, %v1272
  %v1274 = vpop.f32.mrb[0].mxu0
  %1275 = vmatprep.mubr.bf16.mxu0 %v1059
  %1276 = vmatmul.mubr.bf16.gmra.mrb[0].mxu0 %v1058
  %v1277 = vpop.f32.mrb[0].mxu0
  %v1278 = vadd.f32 %v1121, %v1277
  %v1279 = vpop.f32.mrb[0].mxu0
  %v1280 = vpop.f32.mrb[0].mxu0
  %v1281 = vadd.f32 %v1121, %v1280
  %v1282 = vpop.f32.mrb[0].mxu0
  %1283 = vmatprep.mubr.bf16.mxu0 %v1061
  %1284 = vmatmul.mubr.bf16.gmra.mrb[0].mxu0 %v1060
  %v1285 = vpop.f32.mrb[0].mxu0
  %v1286 = vadd.f32 %v1121, %v1285
  %v1287 = vpop.f32.mrb[0].mxu0
  %v1288 = vpop.f32.mrb[0].mxu0
  %v1289 = vadd.f32 %v1121, %v1288
  %v1290 = vpop.f32.mrb[0].mxu0
  %1291 = vmatprep.mubr.bf16.mxu0 %v1063
  %1292 = vmatmul.mubr.bf16.gmra.mrb[0].mxu0 %v1062
  %v1293 = vpop.f32.mrb[0].mxu0
  %v1294 = vadd.f32 %v1121, %v1293
  %v1295 = vpop.f32.mrb[0].mxu0
  %v1296 = vpop.f32.mrb[0].mxu0
  %v1297 = vadd.f32 %v1121, %v1296
  %v1298 = vpop.f32.mrb[0].mxu0
  %1299 = vmatprep.mubr.bf16.mxu0 %v1065
  %1300 = vmatmul.mubr.bf16.gmra.mrb[0].mxu0 %v1064
  %v1301 = vpop.f32.mrb[0].mxu0
  %v1302 = vadd.f32 %v1121, %v1301
  %v1303 = vpop.f32.mrb[0].mxu0
  %v1304 = vpop.f32.mrb[0].mxu0
  %v1305 = vadd.f32 %v1121, %v1304
  %v1306 = vpop.f32.mrb[0].mxu0
  %1307 = vmatprep.mubr.bf16.mxu0 %v1067
  %1308 = vmatmul.mubr.bf16.gmra.mrb[0].mxu0 %v1066
  %v1309 = vpop.f32.mrb[0].mxu0
  %v1310 = vadd.f32 %v1121, %v1309
  %v1311 = vpop.f32.mrb[0].mxu0
  %v1312 = vpop.f32.mrb[0].mxu0
  %v1313 = vadd.f32 %v1121, %v1312
  %v1314 = vpop.f32.mrb[0].mxu0
  %1315 = vmatprep.mubr.bf16.mxu0 %v1069
  %1316 = vmatmul.mubr.bf16.gmra.mrb[0].mxu0 %v1068
  %v1317 = vpop.f32.mrb[0].mxu0
  %v1318 = vadd.f32 %v1121, %v1317
  %v1319 = vpop.f32.mrb[0].mxu0
  %v1320 = vpop.f32.mrb[0].mxu0
  %v1321 = vadd.f32 %v1121, %v1320
  %v1322 = vpop.f32.mrb[0].mxu0
  %1323 = vmatprep.mubr.bf16.mxu0 %v1071
  %1324 = vmatmul.mubr.bf16.gmra.mrb[0].mxu0 %v1070
  %v1325 = vpop.f32.mrb[0].mxu0
  %v1326 = vadd.f32 %v1121, %v1325
  %v1327 = vpop.f32.mrb[0].mxu0
  %v1328 = vpop.f32.mrb[0].mxu0
  %v1329 = vadd.f32 %v1121, %v1328
  %v1330 = vpop.f32.mrb[0].mxu0
  %1331 = vmatprep.mubr.bf16.mxu0 %v1073
  %1332 = vmatmul.mubr.bf16.gmra.mrb[0].mxu0 %v1072
  %v1333 = vpop.f32.mrb[0].mxu0
  %v1334 = vadd.f32 %v1121, %v1333
  %v1335 = vpop.f32.mrb[0].mxu0
  %v1336 = vpop.f32.mrb[0].mxu0
  %v1337 = vadd.f32 %v1121, %v1336
  %v1338 = vpop.f32.mrb[0].mxu0
  %1339 = vmatprep.mubr.bf16.mxu0 %v1075
  %1340 = vmatmul.mubr.bf16.gmra.mrb[0].mxu0 %v1074
  %v1341 = vpop.f32.mrb[0].mxu0
  %v1342 = vadd.f32 %v1121, %v1341
  %v1343 = vpop.f32.mrb[0].mxu0
  %v1344 = vpop.f32.mrb[0].mxu0
  %v1345 = vadd.f32 %v1121, %v1344
  %v1346 = vpop.f32.mrb[0].mxu0
  %1347 = vmatprep.mubr.bf16.mxu0 %v1077
  %1348 = vmatmul.mubr.bf16.gmra.mrb[0].mxu0 %v1076
  %v1349 = vpop.f32.mrb[0].mxu0
  %v1350 = vadd.f32 %v1121, %v1349
  %v1351 = vpop.f32.mrb[0].mxu0
  %v1352 = vpop.f32.mrb[0].mxu0
  %v1353 = vadd.f32 %v1121, %v1352
  %v1354 = vpop.f32.mrb[0].mxu0
  %1355 = vmatprep.mubr.bf16.mxu0 %v1079
  %1356 = vmatmul.mubr.bf16.gmra.mrb[0].mxu0 %v1078
  %v1357 = vpop.f32.mrb[0].mxu0
  %v1358 = vadd.f32 %v1121, %v1357
  %v1359 = vpop.f32.mrb[0].mxu0
  %v1360 = vpop.f32.mrb[0].mxu0
  %v1361 = vadd.f32 %v1121, %v1360
  %v1362 = vpop.f32.mrb[0].mxu0
  %1363 = vmatprep.mubr.bf16.mxu0 %v1081
  %1364 = vmatmul.mubr.bf16.gmra.mrb[0].mxu0 %v1080
  %v1365 = vpop.f32.mrb[0].mxu0
  %v1366 = vadd.f32 %v1121, %v1365
  %v1367 = vpop.f32.mrb[0].mxu0
  %v1368 = vpop.f32.mrb[0].mxu0
  %v1369 = vadd.f32 %v1121, %v1368
  %v1370 = vpop.f32.mrb[0].mxu0
  %1371 = vmatprep.mubr.bf16.mxu0 %v1083
  %1372 = vmatmul.mubr.bf16.gmra.mrb[0].mxu0 %v1082
  %v1373 = vpop.f32.mrb[0].mxu0
  %v1374 = vadd.f32 %v1121, %v1373
  %v1375 = vpop.f32.mrb[0].mxu0
  %v1376 = vpop.f32.mrb[0].mxu0
  %v1377 = vadd.f32 %v1121, %v1376
  %v1378 = vpop.f32.mrb[0].mxu0
  %1379 = vdwg.mxu0
  %v1380 = vmax.f32 %v1254, 0.0
  %v1381 = vmax.f32 %v1257, 0.0
  %v1382 = vmax.f32 %v1262, 0.0
  %v1383 = vmax.f32 %v1265, 0.0
  %v1384 = vmax.f32 %v1270, 0.0
  %v1385 = vmax.f32 %v1273, 0.0
  %v1386 = vmax.f32 %v1278, 0.0
  %v1387 = vmax.f32 %v1281, 0.0
  %v1388 = vmax.f32 %v1286, 0.0
  %v1389 = vmax.f32 %v1289, 0.0
  %v1390 = vmax.f32 %v1294, 0.0
  %v1391 = vmax.f32 %v1297, 0.0
  %v1392 = vmax.f32 %v1302, 0.0
  %v1393 = vmax.f32 %v1305, 0.0
  %v1394 = vmax.f32 %v1310, 0.0
  %v1395 = vmax.f32 %v1313, 0.0
  %v1396 = vmax.f32 %v1318, 0.0
  %v1397 = vmax.f32 %v1321, 0.0
  %v1398 = vmax.f32 %v1326, 0.0
  %v1399 = vmax.f32 %v1329, 0.0
  %v1400 = vmax.f32 %v1334, 0.0
  %v1401 = vmax.f32 %v1337, 0.0
  %v1402 = vmax.f32 %v1342, 0.0
  %v1403 = vmax.f32 %v1345, 0.0
  %v1404 = vmax.f32 %v1350, 0.0
  %v1405 = vmax.f32 %v1353, 0.0
  %v1406 = vmax.f32 %v1358, 0.0
  %v1407 = vmax.f32 %v1361, 0.0
  %v1408 = vmax.f32 %v1366, 0.0
  %v1409 = vmax.f32 %v1369, 0.0
  %v1410 = vmax.f32 %v1374, 0.0
  %v1411 = vmax.f32 %v1377, 0.0
  %v1412 = vpack.c.bf16 %v1381, %v1380
  %v1413 = vpack.c.bf16 %v1383, %v1382
  %v1414 = vpack.c.bf16 %v1385, %v1384
  %v1415 = vpack.c.bf16 %v1387, %v1386
  %v1416 = vpack.c.bf16 %v1389, %v1388
  %v1417 = vpack.c.bf16 %v1391, %v1390
  %v1418 = vpack.c.bf16 %v1393, %v1392
  %v1419 = vpack.c.bf16 %v1395, %v1394
  %v1420 = vpack.c.bf16 %v1397, %v1396
  %v1421 = vpack.c.bf16 %v1399, %v1398
  %v1422 = vpack.c.bf16 %v1401, %v1400
  %v1423 = vpack.c.bf16 %v1403, %v1402
  %v1424 = vpack.c.bf16 %v1405, %v1404
  %v1425 = vpack.c.bf16 %v1407, %v1406
  %v1426 = vpack.c.bf16 %v1409, %v1408
  %v1427 = vpack.c.bf16 %v1411, %v1410
  %vm1428 = vcmask 261120
  %1429 = vst.msk [vmem:[#allocation4] sm:$0xff] %vm1428, %v1412
  %1430 = vst.msk [vmem:[#allocation4 + $0x8] sm:$0xff] %vm1428, %v1413
  %1431 = vst.msk [vmem:[#allocation4 + $0x10] sm:$0xff] %vm1428, %v1414
  %1432 = vst.msk [vmem:[#allocation4 + $0x18] sm:$0xff] %vm1428, %v1415
  %1433 = vst.msk [vmem:[#allocation4 + $0x20] sm:$0xff] %vm1428, %v1416
  %1434 = vst.msk [vmem:[#allocation4 + $0x28] sm:$0xff] %vm1428, %v1417
  %1435 = vst.msk [vmem:[#allocation4 + $0x30] sm:$0xff] %vm1428, %v1418
  %1436 = vst.msk [vmem:[#allocation4 + $0x38] sm:$0xff] %vm1428, %v1419
  %1437 = vst.msk [vmem:[#allocation4 + $0x40] sm:$0xff] %vm1428, %v1420
  %1438 = vst.msk [vmem:[#allocation4 + $0x48] sm:$0xff] %vm1428, %v1421
  %1439 = vst.msk [vmem:[#allocation4 + $0x50] sm:$0xff] %vm1428, %v1422
  %1440 = vst.msk [vmem:[#allocation4 + $0x58] sm:$0xff] %vm1428, %v1423
  %1441 = vst.msk [vmem:[#allocation4 + $0x60] sm:$0xff] %vm1428, %v1424
  %1442 = vst.msk [vmem:[#allocation4 + $0x68] sm:$0xff] %vm1428, %v1425
  %1443 = vst.msk [vmem:[#allocation4 + $0x70] sm:$0xff] %vm1428, %v1426
  %1444 = vst.msk [vmem:[#allocation4 + $0x78] sm:$0xff] %vm1428, %v1427
  %v1445 = vld [vmem:[#allocation4] sm:$0xff]
  %1446 = vst.msk [vmem:[#allocation5] sm:$0xff] %vm1428, %v1445
  %v1447 = vld [vmem:[#allocation4 + $0x8] sm:$0xff]
  %1449 = vrot.lane.b32.xlu0 %v1447, 32
  %v1450 = vpop.permute.xlu0 %1449
  %vm1452 = vcmask 523520
  %1453 = vst.msk [vmem:[#allocation5] sm:$0xff] %vm1452, %v1450
  %v1454 = vld [vmem:[#allocation4 + $0x10] sm:$0xff]
  %1456 = vrot.lane.b32.xlu0 %v1454, 64
  %v1457 = vpop.permute.xlu0 %1456
  %vm1459 = vcmask 785920
  %1460 = vst.msk [vmem:[#allocation5] sm:$0xff] %vm1459, %v1457
  %v1461 = vld [vmem:[#allocation4 + $0x18] sm:$0xff]
  %1463 = vrot.lane.b32.xlu0 %v1461, 96
  %v1464 = vpop.permute.xlu0 %1463
  %vm1466 = vcmask 1048320
  %1467 = vst.msk [vmem:[#allocation5] sm:$0xff] %vm1466, %v1464
  %v1468 = vld [vmem:[#allocation4 + $0x20] sm:$0xff]
  %1469 = vst.msk [vmem:[#allocation5 + $0x8] sm:$0xff] %vm1428, %v1468
  %v1470 = vld [vmem:[#allocation4 + $0x28] sm:$0xff]
  %1472 = vrot.lane.b32.xlu0 %v1470, 32
  %v1473 = vpop.permute.xlu0 %1472
  %1475 = vst.msk [vmem:[#allocation5 + $0x8] sm:$0xff] %vm1452, %v1473
  %v1476 = vld [vmem:[#allocation4 + $0x30] sm:$0xff]
  %1478 = vrot.lane.b32.xlu0 %v1476, 64
  %v1479 = vpop.permute.xlu0 %1478
  %1481 = vst.msk [vmem:[#allocation5 + $0x8] sm:$0xff] %vm1459, %v1479
  %v1482 = vld [vmem:[#allocation4 + $0x38] sm:$0xff]
  %1484 = vrot.lane.b32.xlu0 %v1482, 96
  %v1485 = vpop.permute.xlu0 %1484
  %1487 = vst.msk [vmem:[#allocation5 + $0x8] sm:$0xff] %vm1466, %v1485
  %v1488 = vld [vmem:[#allocation4 + $0x40] sm:$0xff]
  %1489 = vst.msk [vmem:[#allocation5 + $0x10] sm:$0xff] %vm1428, %v1488
  %v1490 = vld [vmem:[#allocation4 + $0x48] sm:$0xff]
  %1492 = vrot.lane.b32.xlu0 %v1490, 32
  %v1493 = vpop.permute.xlu0 %1492
  %1495 = vst.msk [vmem:[#allocation5 + $0x10] sm:$0xff] %vm1452, %v1493
  %v1496 = vld [vmem:[#allocation4 + $0x50] sm:$0xff]
  %1498 = vrot.lane.b32.xlu0 %v1496, 64
  %v1499 = vpop.permute.xlu0 %1498
  %1501 = vst.msk [vmem:[#allocation5 + $0x10] sm:$0xff] %vm1459, %v1499
  %v1502 = vld [vmem:[#allocation4 + $0x58] sm:$0xff]
  %1504 = vrot.lane.b32.xlu0 %v1502, 96
  %v1505 = vpop.permute.xlu0 %1504
  %1507 = vst.msk [vmem:[#allocation5 + $0x10] sm:$0xff] %vm1466, %v1505
  %v1508 = vld [vmem:[#allocation4 + $0x60] sm:$0xff]
  %1509 = vst.msk [vmem:[#allocation5 + $0x18] sm:$0xff] %vm1428, %v1508
  %v1510 = vld [vmem:[#allocation4 + $0x68] sm:$0xff]
  %1512 = vrot.lane.b32.xlu0 %v1510, 32
  %v1513 = vpop.permute.xlu0 %1512
  %1515 = vst.msk [vmem:[#allocation5 + $0x18] sm:$0xff] %vm1452, %v1513
  %v1516 = vld [vmem:[#allocation4 + $0x70] sm:$0xff]
  %1518 = vrot.lane.b32.xlu0 %v1516, 64
  %v1519 = vpop.permute.xlu0 %1518
  %1521 = vst.msk [vmem:[#allocation5 + $0x18] sm:$0xff] %vm1459, %v1519
  %v1522 = vld [vmem:[#allocation4 + $0x78] sm:$0xff]
  %1524 = vrot.lane.b32.xlu0 %v1522, 96
  %v1525 = vpop.permute.xlu0 %1524
  %1527 = vst.msk [vmem:[#allocation5 + $0x18] sm:$0xff] %vm1466, %v1525
  %v1528 = vld [vmem:[#allocation5] sm:$0xff]
  %v1529 = vld [vmem:[#allocation5 + $0x8] sm:$0xff]
  %v1530 = vld [vmem:[#allocation5 + $0x10] sm:$0xff]
  %v1531 = vld [vmem:[#allocation5 + $0x18] sm:$0xff]
  %v1532 = vld [vmem:[%s4] sm:$0xf]
  %v1533 = vld [vmem:[%s4 + $0x4] sm:$0xf]
  %v1534 = vld [vmem:[%s4 + $0x8] sm:$0xf]
  %v1535 = vld [vmem:[%s4 + $0xc] sm:$0xf]
  %v1536 = vld [vmem:[%s4 + $0x10] sm:$0xf]
  %v1537 = vld [vmem:[%s4 + $0x14] sm:$0xf]
  %v1538 = vld [vmem:[%s4 + $0x18] sm:$0xf]
  %v1539 = vld [vmem:[%s4 + $0x1c] sm:$0xf]
  %v1540 = vld [vmem:[%s4 + $0x20] sm:$0xf]
  %v1541 = vld [vmem:[%s4 + $0x24] sm:$0xf]
  %v1542 = vld [vmem:[%s4 + $0x28] sm:$0xf]
  %v1543 = vld [vmem:[%s4 + $0x2c] sm:$0xf]
  %v1544 = vld [vmem:[%s4 + $0x30] sm:$0xf]
  %v1545 = vld [vmem:[%s4 + $0x34] sm:$0xf]
  %v1546 = vld [vmem:[%s4 + $0x38] sm:$0xf]
  %v1547 = vld [vmem:[%s4 + $0x3c] sm:$0xf]
  %v1548 = vld [vmem:[%s4 + $0x40] sm:$0xf]
  %v1549 = vld [vmem:[%s4 + $0x44] sm:$0xf]
  %v1550 = vld [vmem:[%s4 + $0x48] sm:$0xf]
  %v1551 = vld [vmem:[%s4 + $0x4c] sm:$0xf]
  %v1552 = vld [vmem:[%s4 + $0x50] sm:$0xf]
  %v1553 = vld [vmem:[%s4 + $0x54] sm:$0xf]
  %v1554 = vld [vmem:[%s4 + $0x58] sm:$0xf]
  %v1555 = vld [vmem:[%s4 + $0x5c] sm:$0xf]
  %v1556 = vld [vmem:[%s4 + $0x60] sm:$0xf]
  %v1557 = vld [vmem:[%s4 + $0x64] sm:$0xf]
  %v1558 = vld [vmem:[%s4 + $0x68] sm:$0xf]
  %v1559 = vld [vmem:[%s4 + $0x6c] sm:$0xf]
  %v1560 = vld [vmem:[%s4 + $0x70] sm:$0xf]
  %v1561 = vld [vmem:[%s4 + $0x74] sm:$0xf]
  %v1562 = vld [vmem:[%s4 + $0x78] sm:$0xf]
  %v1563 = vld [vmem:[%s4 + $0x7c] sm:$0xf]
  %v1564 = vld [vmem:[%s4 + $0x80] sm:$0xf]
  %v1565 = vld [vmem:[%s4 + $0x84] sm:$0xf]
  %v1566 = vld [vmem:[%s4 + $0x88] sm:$0xf]
  %v1567 = vld [vmem:[%s4 + $0x8c] sm:$0xf]
  %v1568 = vld [vmem:[%s4 + $0x90] sm:$0xf]
  %v1569 = vld [vmem:[%s4 + $0x94] sm:$0xf]
  %v1570 = vld [vmem:[%s4 + $0x98] sm:$0xf]
  %v1571 = vld [vmem:[%s4 + $0x9c] sm:$0xf]
  %v1572 = vld [vmem:[%s4 + $0xa0] sm:$0xf]
  %v1573 = vld [vmem:[%s4 + $0xa4] sm:$0xf]
  %v1574 = vld [vmem:[%s4 + $0xa8] sm:$0xf]
  %v1575 = vld [vmem:[%s4 + $0xac] sm:$0xf]
  %v1576 = vld [vmem:[%s4 + $0xb0] sm:$0xf]
  %v1577 = vld [vmem:[%s4 + $0xb4] sm:$0xf]
  %v1578 = vld [vmem:[%s4 + $0xb8] sm:$0xf]
  %v1579 = vld [vmem:[%s4 + $0xbc] sm:$0xf]
  %v1580 = vld [vmem:[%s4 + $0xc0] sm:$0xf]
  %v1581 = vld [vmem:[%s4 + $0xc4] sm:$0xf]
  %v1582 = vld [vmem:[%s4 + $0xc8] sm:$0xf]
  %v1583 = vld [vmem:[%s4 + $0xcc] sm:$0xf]
  %v1584 = vld [vmem:[%s4 + $0xd0] sm:$0xf]
  %v1585 = vld [vmem:[%s4 + $0xd4] sm:$0xf]
  %v1586 = vld [vmem:[%s4 + $0xd8] sm:$0xf]
  %v1587 = vld [vmem:[%s4 + $0xdc] sm:$0xf]
  %v1588 = vld [vmem:[%s4 + $0xe0] sm:$0xf]
  %v1589 = vld [vmem:[%s4 + $0xe4] sm:$0xf]
  %v1590 = vld [vmem:[%s4 + $0xe8] sm:$0xf]
  %v1591 = vld [vmem:[%s4 + $0xec] sm:$0xf]
  %v1592 = vld [vmem:[%s4 + $0xf0] sm:$0xf]
  %v1593 = vld [vmem:[%s4 + $0xf4] sm:$0xf]
  %v1594 = vld [vmem:[%s4 + $0xf8] sm:$0xf]
  %v1595 = vld [vmem:[%s4 + $0xfc] sm:$0xf]
  %v1596 = vld [vmem:[%s5] sm:$0x1]
  %v1598 = vlaneseq
  %v1599 = vshrl.u32 %v1598, 7
  %v1600 = vsub.s32 0, %v1599
  %v1601 = vrot.slane %v1596, %v1600
  %v1667 = vunpack.c.l.b16 %v1532
  %v1668 = vunpack.c.l.b16 %v1533
  %v1669 = vunpack.c.l.b16 %v1534
  %v1670 = vunpack.c.l.b16 %v1535
  %v1671 = vunpack.c.l.b16 %v1536
  %v1672 = vunpack.c.l.b16 %v1537
  %v1673 = vunpack.c.l.b16 %v1538
  %v1674 = vunpack.c.l.b16 %v1539
  %v1675 = vunpack.c.l.b16 %v1540
  %v1676 = vunpack.c.l.b16 %v1541
  %v1677 = vunpack.c.l.b16 %v1542
  %v1678 = vunpack.c.l.b16 %v1543
  %v1679 = vunpack.c.l.b16 %v1544
  %v1680 = vunpack.c.l.b16 %v1545
  %v1681 = vunpack.c.l.b16 %v1546
  %v1682 = vunpack.c.l.b16 %v1547
  %v1683 = vunpack.c.l.b16 %v1548
  %v1684 = vunpack.c.l.b16 %v1549
  %v1685 = vunpack.c.l.b16 %v1550
  %v1686 = vunpack.c.l.b16 %v1551
  %v1687 = vunpack.c.l.b16 %v1552
  %v1688 = vunpack.c.l.b16 %v1553
  %v1689 = vunpack.c.l.b16 %v1554
  %v1690 = vunpack.c.l.b16 %v1555
  %v1691 = vunpack.c.l.b16 %v1556
  %v1692 = vunpack.c.l.b16 %v1557
  %v1693 = vunpack.c.l.b16 %v1558
  %v1694 = vunpack.c.l.b16 %v1559
  %v1695 = vunpack.c.l.b16 %v1560
  %v1696 = vunpack.c.l.b16 %v1561
  %v1697 = vunpack.c.l.b16 %v1562
  %v1698 = vunpack.c.l.b16 %v1563
  %v1699 = vunpack.c.l.b16 %v1564
  %v1700 = vunpack.c.l.b16 %v1565
  %v1701 = vunpack.c.l.b16 %v1566
  %v1702 = vunpack.c.l.b16 %v1567
  %v1703 = vunpack.c.l.b16 %v1568
  %v1704 = vunpack.c.l.b16 %v1569
  %v1705 = vunpack.c.l.b16 %v1570
  %v1706 = vunpack.c.l.b16 %v1571
  %v1707 = vunpack.c.l.b16 %v1572
  %v1708 = vunpack.c.l.b16 %v1573
  %v1709 = vunpack.c.l.b16 %v1574
  %v1710 = vunpack.c.l.b16 %v1575
  %v1711 = vunpack.c.l.b16 %v1576
  %v1712 = vunpack.c.l.b16 %v1577
  %v1713 = vunpack.c.l.b16 %v1578
  %v1714 = vunpack.c.l.b16 %v1579
  %v1715 = vunpack.c.l.b16 %v1580
  %v1716 = vunpack.c.l.b16 %v1581
  %v1717 = vunpack.c.l.b16 %v1582
  %v1718 = vunpack.c.l.b16 %v1583
  %v1719 = vunpack.c.l.b16 %v1584
  %v1720 = vunpack.c.l.b16 %v1585
  %v1721 = vunpack.c.l.b16 %v1586
  %v1722 = vunpack.c.l.b16 %v1587
  %v1723 = vunpack.c.l.b16 %v1588
  %v1724 = vunpack.c.l.b16 %v1589
  %v1725 = vunpack.c.l.b16 %v1590
  %v1726 = vunpack.c.l.b16 %v1591
  %v1727 = vunpack.c.l.b16 %v1592
  %v1728 = vunpack.c.l.b16 %v1593
  %v1729 = vunpack.c.l.b16 %v1594
  %v1730 = vunpack.c.l.b16 %v1595
  %v1731 = vpack.c.b16 %v1668, %v1667
  %v1732 = vpack.c.b16 %v1670, %v1669
  %v1733 = vpack.c.b16 %v1672, %v1671
  %v1734 = vpack.c.b16 %v1674, %v1673
  %v1735 = vpack.c.b16 %v1676, %v1675
  %v1736 = vpack.c.b16 %v1678, %v1677
  %v1737 = vpack.c.b16 %v1680, %v1679
  %v1738 = vpack.c.b16 %v1682, %v1681
  %v1739 = vpack.c.b16 %v1684, %v1683
  %v1740 = vpack.c.b16 %v1686, %v1685
  %v1741 = vpack.c.b16 %v1688, %v1687
  %v1742 = vpack.c.b16 %v1690, %v1689
  %v1743 = vpack.c.b16 %v1692, %v1691
  %v1744 = vpack.c.b16 %v1694, %v1693
  %v1745 = vpack.c.b16 %v1696, %v1695
  %v1746 = vpack.c.b16 %v1698, %v1697
  %v1747 = vpack.c.b16 %v1700, %v1699
  %v1748 = vpack.c.b16 %v1702, %v1701
  %v1749 = vpack.c.b16 %v1704, %v1703
  %v1750 = vpack.c.b16 %v1706, %v1705
  %v1751 = vpack.c.b16 %v1708, %v1707
  %v1752 = vpack.c.b16 %v1710, %v1709
  %v1753 = vpack.c.b16 %v1712, %v1711
  %v1754 = vpack.c.b16 %v1714, %v1713
  %v1755 = vpack.c.b16 %v1716, %v1715
  %v1756 = vpack.c.b16 %v1718, %v1717
  %v1757 = vpack.c.b16 %v1720, %v1719
  %v1758 = vpack.c.b16 %v1722, %v1721
  %v1759 = vpack.c.b16 %v1724, %v1723
  %v1760 = vpack.c.b16 %v1726, %v1725
  %v1761 = vpack.c.b16 %v1728, %v1727
  %v1762 = vpack.c.b16 %v1730, %v1729
  %1795 = vmatprep.subr.bf16.mxu0 0
  %1796 = vmatpush1.bf16.msra.mxu0 %v1731
  %1797 = vmatprep.subr.bf16.mxu0 0
  %1798 = vmatpush1.bf16.msra.mxu0 %v1732
  %1799 = vmatprep.subr.bf16.mxu0 0
  %1800 = vmatpush1.bf16.msra.mxu0 %v1733
  %1801 = vmatprep.subr.bf16.mxu0 0
  %1802 = vmatpush1.bf16.msra.mxu0 %v1734
  %1803 = vmatprep.subr.bf16.mxu0 0
  %1804 = vmatpush1.bf16.msra.mxu0 %v1735
  %1805 = vmatprep.subr.bf16.mxu0 0
  %1806 = vmatpush1.bf16.msra.mxu0 %v1736
  %1807 = vmatprep.subr.bf16.mxu0 0
  %1808 = vmatpush1.bf16.msra.mxu0 %v1737
  %1809 = vmatprep.subr.bf16.mxu0 0
  %1810 = vmatpush1.bf16.msra.mxu0 %v1738
  %1811 = vmatprep.subr.bf16.mxu0 0
  %1812 = vmatpush1.bf16.msra.mxu0 %v1739
  %1813 = vmatprep.subr.bf16.mxu0 0
  %1814 = vmatpush1.bf16.msra.mxu0 %v1740
  %1815 = vmatprep.subr.bf16.mxu0 0
  %1816 = vmatpush1.bf16.msra.mxu0 %v1741
  %1817 = vmatprep.subr.bf16.mxu0 0
  %1818 = vmatpush1.bf16.msra.mxu0 %v1742
  %1819 = vmatprep.subr.bf16.mxu0 0
  %1820 = vmatpush1.bf16.msra.mxu0 %v1743
  %1821 = vmatprep.subr.bf16.mxu0 0
  %1822 = vmatpush1.bf16.msra.mxu0 %v1744
  %1823 = vmatprep.subr.bf16.mxu0 0
  %1824 = vmatpush1.bf16.msra.mxu0 %v1745
  %1825 = vmatprep.subr.bf16.mxu0 0
  %1826 = vmatpush1.bf16.msra.mxu0 %v1746
  %1827 = vmatprep.mubr.bf16.mxu0 %v1529
  %1828 = vmatmul.mubr.bf16.gmra.mrb[0].mxu0 %v1528
  %v1829 = vpop.f32.mrb[0].mxu0
  %v1830 = vadd.f32 %v1601, %v1829
  %v1831 = vpop.f32.mrb[0].mxu0
  %v1832 = vpop.f32.mrb[0].mxu0
  %v1833 = vadd.f32 %v1601, %v1832
  %v1834 = vpop.f32.mrb[0].mxu0
  %1835 = vdwg.mxu0
  %1836 = vmatprep.subr.bf16.mxu0 0
  %1837 = vmatpush1.bf16.msra.mxu0 %v1747
  %1838 = vmatprep.subr.bf16.mxu0 0
  %1839 = vmatpush1.bf16.msra.mxu0 %v1748
  %1840 = vmatprep.subr.bf16.mxu0 0
  %1841 = vmatpush1.bf16.msra.mxu0 %v1749
  %1842 = vmatprep.subr.bf16.mxu0 0
  %1843 = vmatpush1.bf16.msra.mxu0 %v1750
  %1844 = vmatprep.subr.bf16.mxu0 0
  %1845 = vmatpush1.bf16.msra.mxu0 %v1751
  %1846 = vmatprep.subr.bf16.mxu0 0
  %1847 = vmatpush1.bf16.msra.mxu0 %v1752
  %1848 = vmatprep.subr.bf16.mxu0 0
  %1849 = vmatpush1.bf16.msra.mxu0 %v1753
  %1850 = vmatprep.subr.bf16.mxu0 0
  %1851 = vmatpush1.bf16.msra.mxu0 %v1754
  %1852 = vmatprep.subr.bf16.mxu0 0
  %1853 = vmatpush1.bf16.msra.mxu0 %v1755
  %1854 = vmatprep.subr.bf16.mxu0 0
  %1855 = vmatpush1.bf16.msra.mxu0 %v1756
  %1856 = vmatprep.subr.bf16.mxu0 0
  %1857 = vmatpush1.bf16.msra.mxu0 %v1757
  %1858 = vmatprep.subr.bf16.mxu0 0
  %1859 = vmatpush1.bf16.msra.mxu0 %v1758
  %1860 = vmatprep.subr.bf16.mxu0 0
  %1861 = vmatpush1.bf16.msra.mxu0 %v1759
  %1862 = vmatprep.subr.bf16.mxu0 0
  %1863 = vmatpush1.bf16.msra.mxu0 %v1760
  %1864 = vmatprep.subr.bf16.mxu0 0
  %1865 = vmatpush1.bf16.msra.mxu0 %v1761
  %1866 = vmatprep.subr.bf16.mxu0 0
  %1867 = vmatpush1.bf16.msra.mxu0 %v1762
  %1868 = vmatprep.mubr.bf16.mxu0 %v1531
  %1869 = vmatmul.mubr.bf16.gmra.mrb[0].mxu0 %v1530
  %v1870 = vpop.f32.mrb[0].mxu0
  %v1871 = vadd.f32 %v1830, %v1870
  %v1872 = vpop.f32.mrb[0].mxu0
  %v1873 = vpop.f32.mrb[0].mxu0
  %v1874 = vadd.f32 %v1833, %v1873
  %v1875 = vpop.f32.mrb[0].mxu0
  %1876 = vdwg.mxu0
  %v1877 = vmax.f32 %v1871, 0.0
  %v1878 = vmax.f32 %v1874, 0.0
  %v1879 = vpack.c.bf16 %v1878, %v1877
  %v1880 = vld [vmem:[%s6] sm:$0xf]
  %v1881 = vld [vmem:[%s6 + $0x4] sm:$0xf]
  %v1882 = vld [vmem:[%s6 + $0x8] sm:$0xf]
  %v1883 = vld [vmem:[%s6 + $0xc] sm:$0xf]
  %v1884 = vld [vmem:[%s6 + $0x10] sm:$0xf]
  %v1885 = vld [vmem:[%s6 + $0x14] sm:$0xf]
  %v1886 = vld [vmem:[%s6 + $0x18] sm:$0xf]
  %v1887 = vld [vmem:[%s6 + $0x1c] sm:$0xf]
  %v1888 = vld [vmem:[%s7] sm:$0x1]
  %v1890 = vlaneseq
  %v1891 = vshrl.u32 %v1890, 7
  %v1892 = vsub.s32 0, %v1891
  %v1893 = vrot.slane %v1888, %v1892
  %v1903 = vunpack.c.l.b16 %v1880
  %v1904 = vunpack.c.l.b16 %v1881
  %v1905 = vunpack.c.l.b16 %v1882
  %v1906 = vunpack.c.l.b16 %v1883
  %v1907 = vunpack.c.l.b16 %v1884
  %v1908 = vunpack.c.l.b16 %v1885
  %v1909 = vunpack.c.l.b16 %v1886
  %v1910 = vunpack.c.l.b16 %v1887
  %v1911 = vpack.c.b16 %v1904, %v1903
  %v1912 = vpack.c.b16 %v1906, %v1905
  %v1913 = vpack.c.b16 %v1908, %v1907
  %v1914 = vpack.c.b16 %v1910, %v1909
  %v1920 = vsel %vm769, %v1879, 0
  %1922 = vmatprep.subr.bf16.mxu0 0
  %1923 = vmatpush1.bf16.msra.mxu0 %v1911
  %1924 = vmatprep.subr.bf16.mxu0 0
  %1925 = vmatpush1.bf16.msra.mxu0 %v1912
  %1926 = vmatprep.subr.bf16.mxu0 0
  %1927 = vmatpush1.bf16.msra.mxu0 %v1913
  %1928 = vmatprep.subr.bf16.mxu0 0
  %1929 = vmatpush1.bf16.msra.mxu0 %v1914
  %1930 = vmatprep.subr.bf16.mxu0 0
  %1931 = vmatpush1.bf16.msra.mxu0 0
  %1932 = vmatprep.subr.bf16.mxu0 0
  %1933 = vmatpush1.bf16.msra.mxu0 0
  %1934 = vmatprep.subr.bf16.mxu0 0
  %1935 = vmatpush1.bf16.msra.mxu0 0
  %1936 = vmatprep.subr.bf16.mxu0 0
  %1937 = vmatpush1.bf16.msra.mxu0 0
  %1938 = vmatprep.subr.bf16.mxu0 0
  %1939 = vmatpush1.bf16.msra.mxu0 0
  %1940 = vmatprep.subr.bf16.mxu0 0
  %1941 = vmatpush1.bf16.msra.mxu0 0
  %1942 = vmatprep.subr.bf16.mxu0 0
  %1943 = vmatpush1.bf16.msra.mxu0 0
  %1944 = vmatprep.subr.bf16.mxu0 0
  %1945 = vmatpush1.bf16.msra.mxu0 0
  %1946 = vmatprep.subr.bf16.mxu0 0
  %1947 = vmatpush1.bf16.msra.mxu0 0
  %1948 = vmatprep.subr.bf16.mxu0 0
  %1949 = vmatpush1.bf16.msra.mxu0 0
  %1950 = vmatprep.subr.bf16.mxu0 0
  %1951 = vmatpush1.bf16.msra.mxu0 0
  %1952 = vmatprep.subr.bf16.mxu0 0
  %1953 = vmatpush1.bf16.msra.mxu0 0
  %1954 = vmatprep.mubr.bf16.mxu0 0
  %1955 = vmatmul.mubr.bf16.gmra.mrb[0].mxu0 %v1920
  %v1956 = vpop.f32.mrb[0].mxu0
  %v1957 = vadd.f32 %v1893, %v1956
  %v1958 = vpop.f32.mrb[0].mxu0
  %v1959 = vpop.f32.mrb[0].mxu0
  %v1960 = vadd.f32 %v1893, %v1959
  %v1961 = vpop.f32.mrb[0].mxu0
  %1962 = vdwg.mxu0
  %vm1963 = vcmask 64512
  %1964 = vst.msk [vmem:[%s8] sm:$0xff] %vm1963, %v1957
  %1965 = vst.msk [vmem:[%s8 + $0x8] sm:$0xff] %vm1963, %v1960
  // Predicated region
  $region34: #{qnet_forward.1} parent=0 // pred_check
    _
  $region35: #{qnet_forward.1} parent=0 // pred_check_branch
    %1967 = sbr.rel (0) target = $region37
  $region36: #{qnet_forward.1} parent=0 // pred_region
    _
  $region37: #{qnet_forward.1} parent=0 // pred_fallthru
    _
  // Predicated region
  $region38: #{qnet_forward.1} parent=0 // pred_check
    _
  $region39: #{qnet_forward.1} parent=0 // pred_check_branch
    %1969 = sbr.rel (0) target = $region41
  $region40: #{qnet_forward.1} parent=0 // pred_region
    _
  $region41: #{qnet_forward.1} parent=0 // pred_fallthru
    _

</llo_original>
